<compile_context>
chip_gen: v7x
topology: tpu7x:2x2x1
jax: 0.10.0
libtpu: 0.0.40
codegen_flags: <defaults>
</compile_context>

<pallas_src>
import functools

import jax
import jax.numpy as jnp
from jax.experimental import pallas as pl
from jax.experimental.pallas import tpu as pltpu

K_SPLINE = 3                                  # MultKAN default k
G_INTERVALS = 3                               # MultKAN default grid
N_BASIS = G_INTERVALS + K_SPLINE              # J = G + k basis fns per input
N_GRID_PTS = G_INTERVALS + 2 * K_SPLINE + 1   # extended knot count
GRID_LO, GRID_HI = -1.0, 1.0                  # MultKAN default grid_range
H_GRID = (GRID_HI - GRID_LO) / G_INTERVALS
KNOTS = tuple(float(GRID_LO - K_SPLINE * H_GRID + m * H_GRID)
              for m in range(N_GRID_PTS))


# --------------------------- fused encoder kernel ---------------------------
def _encoder_kernel(x_ref, w_ref, b_ref, mu_ref, lv_ref, std_ref, *,
                    layer_dims, emb):
    n_layers = len(layer_dims)
    x = x_ref[...]                                         # (TB, data_dim)

    for l, (n_in, n_out) in enumerate(layer_dims):
        # ---- B-spline basis: Cox-de Boor on a uniform grid, scalar knots ----
        # degree-0 via step-function differences (monotone knots).
        ge = [(x >= kn).astype(jnp.float32) for kn in KNOTS]
        basis = [ge[j] - ge[j + 1] for j in range(N_GRID_PTS - 1)]
        # hoisted knot differences, reused by every recursion level.
        d = [x - kn for kn in KNOTS]
        for p in range(1, K_SPLINE + 1):
            inv = 1.0 / (p * H_GRID)                       # compile-time const
            basis = [(d[j] * basis[j] - d[j + p + 1] * basis[j + 1]) * inv
                     for j in range(len(basis) - 1)]
        # after k steps len(basis) == N_BASIS

        # ---- fused base + spline branch: ONE matmul over K = (J+1)*n_in ----
        sig = 0.5 * jnp.tanh(0.5 * x) + 0.5                # exact sigmoid, EUP
        act = jnp.concatenate([x * sig] + basis, axis=1)   # (TB, (J+1)*n_in)
        w = w_ref[l, : (N_BASIS + 1) * n_in, :n_out]       # static view
        x = jnp.dot(act, w, preferred_element_type=jnp.float32)

    # ---- fc1 / fc2 heads: row-stacked weights, dense per-output stores ----
    w1 = w_ref[n_layers, :emb, :emb]
    w2 = w_ref[n_layers, emb:2 * emb, :emb]
    b = b_ref[...]                                         # (2, emb)
    mu = jnp.dot(x, w1, preferred_element_type=jnp.float32) + b[0:1, :]
    lv = jnp.dot(x, w2, preferred_element_type=jnp.float32) + b[1:2, :]
    mu_ref[...] = mu
    lv_ref[...] = lv
    std_ref[...] = jnp.exp(0.5 * lv)


def encoder_forward(x, w_packed, b_head, layer_dims, embedding_dim,
                    *, batch_tile=512):
    """Runs the whole Encoder in a single pallas_call with a parallel batch
    grid axis (one step at small batch; megacore-sharded on v7x at scale)."""
    batch, data_dim = x.shape
    tb = batch if batch <= batch_tile else batch_tile
    grid = (pl.cdiv(batch, tb),)

    kernel = functools.partial(_encoder_kernel,
                               layer_dims=tuple(layer_dims),
                               emb=embedding_dim)
    out_sds = jax.ShapeDtypeStruct((batch, embedding_dim), jnp.float32)
    out_spec = pl.BlockSpec((tb, embedding_dim), lambda i: (i, 0))

    mu, logvar, std = pl.pallas_call(
        kernel,
        out_shape=(out_sds, out_sds, out_sds),
        grid=grid,
        in_specs=[
            pl.BlockSpec((tb, data_dim), lambda i: (i, 0)),
            pl.BlockSpec(w_packed.shape, lambda i: (0, 0, 0)),   # resident
            pl.BlockSpec(b_head.shape, lambda i: (0, 0)),        # resident
        ],
        out_specs=(out_spec, out_spec, out_spec),
        compiler_params=pltpu.CompilerParams(
            dimension_semantics=("parallel",)),
    )(x, w_packed, b_head)
    return mu, std, logvar


# ------------------------------ parameter glue -------------------------------
def init_encoder_params(key, data_dim, compress_dims, embedding_dim):
    """Builds the packed weight slab.

    Per KAN layer the fused matmul weight is
        W_layer = [scale_base ; (scale_sp*coef)[:, :, 0] ; ... ; [..., J-1]]
    of shape ((J+1)*n_in, n_out), matching the kernel's activation slab
    [silu(x) | B_0 | ... | B_{J-1}].  The fc1/fc2 head weights are stacked
    along rows in the last slab entry.  (nn.Linear stores (out, in); we keep
    the transposed (in, out) layout — transpose when loading a checkpoint.)
    pykan node/subnode scale=1 / bias=0 defaults are identity -> folded away.
    """
    width = [data_dim] + list(compress_dims) + [embedding_dim]
    layer_dims = tuple(zip(width[:-1], width[1:]))
    n_layers = len(layer_dims)

    k_rows = max([(N_BASIS + 1) * i for i, _ in layer_dims]
                 + [2 * embedding_dim])
    n_cols = max([o for _, o in layer_dims] + [embedding_dim])
    w_packed = jnp.zeros((n_layers + 1, k_rows, n_cols), jnp.float32)

    for l, (n_in, n_out) in enumerate(layer_dims):
        key, k1, k2, k3 = jax.random.split(key, 4)
        coef = 0.1 * jax.random.normal(k1, (n_in, n_out, N_BASIS), jnp.float32)
        scale_sp = 1.0 + 0.05 * jax.random.normal(k2, (n_in, n_out),
                                                  jnp.float32)
        scale_base = (1.0 / jnp.sqrt(float(n_in))) * (
            1.0 + 0.1 * jax.random.normal(k3, (n_in, n_out), jnp.float32))
        w_sp = jnp.transpose(coef * scale_sp[:, :, None], (2, 0, 1)).reshape(
            N_BASIS * n_in, n_out)
        w_layer = jnp.concatenate([scale_base, w_sp], axis=0)
        w_packed = w_packed.at[l, : (N_BASIS + 1) * n_in, :n_out].set(w_layer)

    key, k1, k2, k3, k4 = jax.random.split(key, 5)
    bound = 1.0 / float(embedding_dim) ** 0.5
    w1 = jax.random.uniform(k1, (embedding_dim, embedding_dim), jnp.float32,
                            -bound, bound)
    b1 = jax.random.uniform(k2, (1, embedding_dim), jnp.float32, -bound, bound)
    w2 = jax.random.uniform(k3, (embedding_dim, embedding_dim), jnp.float32,
                            -bound, bound)
    b2 = jax.random.uniform(k4, (1, embedding_dim), jnp.float32, -bound, bound)
    w_packed = w_packed.at[n_layers, :embedding_dim, :embedding_dim].set(w1)
    w_packed = w_packed.at[
        n_layers, embedding_dim:2 * embedding_dim, :embedding_dim].set(w2)
    b_head = jnp.concatenate([b1, b2], axis=0)            # (2, emb)
    return w_packed, b_head, layer_dims


if __name__ == "__main__":
    data_dim, compress_dims, embedding_dim = 16, (32, 16), 8
    batch = 8

    key = jax.random.PRNGKey(0)
    key, pkey, xkey = jax.random.split(key, 3)
    w_packed, b_head, layer_dims = init_encoder_params(
        pkey, data_dim, compress_dims, embedding_dim)
    x = jax.random.uniform(xkey, (batch, data_dim), jnp.float32, -1.0, 1.0)

    mu, std, logvar = encoder_forward(x, w_packed, b_head, layer_dims,
                                      embedding_dim)
    jax.block_until_ready((mu, std, logvar))

    assert mu.shape == (batch, embedding_dim)
    assert std.shape == (batch, embedding_dim)
    assert logvar.shape == (batch, embedding_dim)
    assert bool(jnp.all(jnp.isfinite(mu)))
    assert bool(jnp.all(jnp.isfinite(std)))
    assert bool(jnp.all(jnp.isfinite(logvar)))
    assert bool(jnp.all(std > 0.0))
    print("KERNEL_OK")
</pallas_src>

<mosaic_0001>
module attributes {stable_mosaic.version = 11 : i64} {
  func.func @_encoder_kernel(%arg0: i32, %arg1: memref<8x16xf32, #tpu.memory_space<vmem>>, %arg2: memref<4x224x32xf32, #tpu.memory_space<vmem>>, %arg3: memref<2x8xf32, #tpu.memory_space<vmem>>, %arg4: memref<8x8xf32, #tpu.memory_space<vmem>>, %arg5: memref<8x8xf32, #tpu.memory_space<vmem>>, %arg6: memref<8x8xf32, #tpu.memory_space<vmem>>) attributes {dimension_semantics = [#tpu.dimension_semantics<parallel>], iteration_bounds = array<i64: 1>, scalar_prefetch = 0 : i64, scratch_operands = 0 : i64, tpu.core_type = #tpu.core_type<tc>, window_params = [{transform_indices = @transform_0, window_bounds = array<i64: 8, 16>}, {pipeline_mode = #tpu.pipeline_mode<synchronous>, transform_indices = @transform_1, window_bounds = array<i64: 4, 224, 32>}, {pipeline_mode = #tpu.pipeline_mode<synchronous>, transform_indices = @transform_2, window_bounds = array<i64: 2, 8>}, {transform_indices = @transform_3, window_bounds = array<i64: 8, 8>}, {transform_indices = @transform_4, window_bounds = array<i64: 8, 8>}, {transform_indices = @transform_5, window_bounds = array<i64: 8, 8>}]} {
    %c0 = arith.constant 0 : index
    %c0_0 = arith.constant 0 : index
    %0 = vector.load %arg1[%c0, %c0_0] : memref<8x16xf32, #tpu.memory_space<vmem>>, vector<8x16xf32>
    %cst = arith.constant -3.000000e+00 : f32
    %1 = vector.broadcast %cst : f32 to vector<8x16xf32>
    %2 = arith.cmpf oge, %0, %1 : vector<8x16xf32>
    %3 = arith.extui %2 : vector<8x16xi1> to vector<8x16xi32>
    %4 = arith.sitofp %3 : vector<8x16xi32> to vector<8x16xf32>
    %cst_1 = arith.constant -2.33333325 : f32
    %5 = vector.broadcast %cst_1 : f32 to vector<8x16xf32>
    %6 = arith.cmpf oge, %0, %5 : vector<8x16xf32>
    %7 = arith.extui %6 : vector<8x16xi1> to vector<8x16xi32>
    %8 = arith.sitofp %7 : vector<8x16xi32> to vector<8x16xf32>
    %cst_2 = arith.constant -1.66666663 : f32
    %9 = vector.broadcast %cst_2 : f32 to vector<8x16xf32>
    %10 = arith.cmpf oge, %0, %9 : vector<8x16xf32>
    %11 = arith.extui %10 : vector<8x16xi1> to vector<8x16xi32>
    %12 = arith.sitofp %11 : vector<8x16xi32> to vector<8x16xf32>
    %cst_3 = arith.constant -1.000000e+00 : f32
    %13 = vector.broadcast %cst_3 : f32 to vector<8x16xf32>
    %14 = arith.cmpf oge, %0, %13 : vector<8x16xf32>
    %15 = arith.extui %14 : vector<8x16xi1> to vector<8x16xi32>
    %16 = arith.sitofp %15 : vector<8x16xi32> to vector<8x16xf32>
    %cst_4 = arith.constant -0.333333343 : f32
    %17 = vector.broadcast %cst_4 : f32 to vector<8x16xf32>
    %18 = arith.cmpf oge, %0, %17 : vector<8x16xf32>
    %19 = arith.extui %18 : vector<8x16xi1> to vector<8x16xi32>
    %20 = arith.sitofp %19 : vector<8x16xi32> to vector<8x16xf32>
    %cst_5 = arith.constant 0.333333343 : f32
    %21 = vector.broadcast %cst_5 : f32 to vector<8x16xf32>
    %22 = arith.cmpf oge, %0, %21 : vector<8x16xf32>
    %23 = arith.extui %22 : vector<8x16xi1> to vector<8x16xi32>
    %24 = arith.sitofp %23 : vector<8x16xi32> to vector<8x16xf32>
    %cst_6 = arith.constant 1.000000e+00 : f32
    %25 = vector.broadcast %cst_6 : f32 to vector<8x16xf32>
    %26 = arith.cmpf oge, %0, %25 : vector<8x16xf32>
    %27 = arith.extui %26 : vector<8x16xi1> to vector<8x16xi32>
    %28 = arith.sitofp %27 : vector<8x16xi32> to vector<8x16xf32>
    %cst_7 = arith.constant 1.66666663 : f32
    %29 = vector.broadcast %cst_7 : f32 to vector<8x16xf32>
    %30 = arith.cmpf oge, %0, %29 : vector<8x16xf32>
    %31 = arith.extui %30 : vector<8x16xi1> to vector<8x16xi32>
    %32 = arith.sitofp %31 : vector<8x16xi32> to vector<8x16xf32>
    %cst_8 = arith.constant 2.33333325 : f32
    %33 = vector.broadcast %cst_8 : f32 to vector<8x16xf32>
    %34 = arith.cmpf oge, %0, %33 : vector<8x16xf32>
    %35 = arith.extui %34 : vector<8x16xi1> to vector<8x16xi32>
    %36 = arith.sitofp %35 : vector<8x16xi32> to vector<8x16xf32>
    %cst_9 = arith.constant 3.000000e+00 : f32
    %37 = vector.broadcast %cst_9 : f32 to vector<8x16xf32>
    %38 = arith.cmpf oge, %0, %37 : vector<8x16xf32>
    %39 = arith.extui %38 : vector<8x16xi1> to vector<8x16xi32>
    %40 = arith.sitofp %39 : vector<8x16xi32> to vector<8x16xf32>
    %41 = arith.subf %4, %8 : vector<8x16xf32>
    %42 = arith.subf %8, %12 : vector<8x16xf32>
    %43 = arith.subf %12, %16 : vector<8x16xf32>
    %44 = arith.subf %16, %20 : vector<8x16xf32>
    %45 = arith.subf %20, %24 : vector<8x16xf32>
    %46 = arith.subf %24, %28 : vector<8x16xf32>
    %47 = arith.subf %28, %32 : vector<8x16xf32>
    %48 = arith.subf %32, %36 : vector<8x16xf32>
    %49 = arith.subf %36, %40 : vector<8x16xf32>
    %cst_10 = arith.constant -3.000000e+00 : f32
    %50 = vector.broadcast %cst_10 : f32 to vector<8x16xf32>
    %51 = arith.subf %0, %50 : vector<8x16xf32>
    %cst_11 = arith.constant -2.33333325 : f32
    %52 = vector.broadcast %cst_11 : f32 to vector<8x16xf32>
    %53 = arith.subf %0, %52 : vector<8x16xf32>
    %cst_12 = arith.constant -1.66666663 : f32
    %54 = vector.broadcast %cst_12 : f32 to vector<8x16xf32>
    %55 = arith.subf %0, %54 : vector<8x16xf32>
    %cst_13 = arith.constant -1.000000e+00 : f32
    %56 = vector.broadcast %cst_13 : f32 to vector<8x16xf32>
    %57 = arith.subf %0, %56 : vector<8x16xf32>
    %cst_14 = arith.constant -0.333333343 : f32
    %58 = vector.broadcast %cst_14 : f32 to vector<8x16xf32>
    %59 = arith.subf %0, %58 : vector<8x16xf32>
    %cst_15 = arith.constant 0.333333343 : f32
    %60 = vector.broadcast %cst_15 : f32 to vector<8x16xf32>
    %61 = arith.subf %0, %60 : vector<8x16xf32>
    %cst_16 = arith.constant 1.000000e+00 : f32
    %62 = vector.broadcast %cst_16 : f32 to vector<8x16xf32>
    %63 = arith.subf %0, %62 : vector<8x16xf32>
    %cst_17 = arith.constant 1.66666663 : f32
    %64 = vector.broadcast %cst_17 : f32 to vector<8x16xf32>
    %65 = arith.subf %0, %64 : vector<8x16xf32>
    %cst_18 = arith.constant 2.33333325 : f32
    %66 = vector.broadcast %cst_18 : f32 to vector<8x16xf32>
    %67 = arith.subf %0, %66 : vector<8x16xf32>
    %cst_19 = arith.constant 3.000000e+00 : f32
    %68 = vector.broadcast %cst_19 : f32 to vector<8x16xf32>
    %69 = arith.subf %0, %68 : vector<8x16xf32>
    %70 = arith.mulf %51, %41 : vector<8x16xf32>
    %71 = arith.mulf %55, %42 : vector<8x16xf32>
    %72 = arith.subf %70, %71 : vector<8x16xf32>
    %cst_20 = arith.constant 1.500000e+00 : f32
    %73 = vector.broadcast %cst_20 : f32 to vector<8x16xf32>
    %74 = arith.mulf %72, %73 : vector<8x16xf32>
    %75 = arith.mulf %53, %42 : vector<8x16xf32>
    %76 = arith.mulf %57, %43 : vector<8x16xf32>
    %77 = arith.subf %75, %76 : vector<8x16xf32>
    %cst_21 = arith.constant 1.500000e+00 : f32
    %78 = vector.broadcast %cst_21 : f32 to vector<8x16xf32>
    %79 = arith.mulf %77, %78 : vector<8x16xf32>
    %80 = arith.mulf %55, %43 : vector<8x16xf32>
    %81 = arith.mulf %59, %44 : vector<8x16xf32>
    %82 = arith.subf %80, %81 : vector<8x16xf32>
    %cst_22 = arith.constant 1.500000e+00 : f32
    %83 = vector.broadcast %cst_22 : f32 to vector<8x16xf32>
    %84 = arith.mulf %82, %83 : vector<8x16xf32>
    %85 = arith.mulf %57, %44 : vector<8x16xf32>
    %86 = arith.mulf %61, %45 : vector<8x16xf32>
    %87 = arith.subf %85, %86 : vector<8x16xf32>
    %cst_23 = arith.constant 1.500000e+00 : f32
    %88 = vector.broadcast %cst_23 : f32 to vector<8x16xf32>
    %89 = arith.mulf %87, %88 : vector<8x16xf32>
    %90 = arith.mulf %59, %45 : vector<8x16xf32>
    %91 = arith.mulf %63, %46 : vector<8x16xf32>
    %92 = arith.subf %90, %91 : vector<8x16xf32>
    %cst_24 = arith.constant 1.500000e+00 : f32
    %93 = vector.broadcast %cst_24 : f32 to vector<8x16xf32>
    %94 = arith.mulf %92, %93 : vector<8x16xf32>
    %95 = arith.mulf %61, %46 : vector<8x16xf32>
    %96 = arith.mulf %65, %47 : vector<8x16xf32>
    %97 = arith.subf %95, %96 : vector<8x16xf32>
    %cst_25 = arith.constant 1.500000e+00 : f32
    %98 = vector.broadcast %cst_25 : f32 to vector<8x16xf32>
    %99 = arith.mulf %97, %98 : vector<8x16xf32>
    %100 = arith.mulf %63, %47 : vector<8x16xf32>
    %101 = arith.mulf %67, %48 : vector<8x16xf32>
    %102 = arith.subf %100, %101 : vector<8x16xf32>
    %cst_26 = arith.constant 1.500000e+00 : f32
    %103 = vector.broadcast %cst_26 : f32 to vector<8x16xf32>
    %104 = arith.mulf %102, %103 : vector<8x16xf32>
    %105 = arith.mulf %65, %48 : vector<8x16xf32>
    %106 = arith.mulf %69, %49 : vector<8x16xf32>
    %107 = arith.subf %105, %106 : vector<8x16xf32>
    %cst_27 = arith.constant 1.500000e+00 : f32
    %108 = vector.broadcast %cst_27 : f32 to vector<8x16xf32>
    %109 = arith.mulf %107, %108 : vector<8x16xf32>
    %110 = arith.mulf %51, %74 : vector<8x16xf32>
    %111 = arith.mulf %57, %79 : vector<8x16xf32>
    %112 = arith.subf %110, %111 : vector<8x16xf32>
    %cst_28 = arith.constant 7.500000e-01 : f32
    %113 = vector.broadcast %cst_28 : f32 to vector<8x16xf32>
    %114 = arith.mulf %112, %113 : vector<8x16xf32>
    %115 = arith.mulf %53, %79 : vector<8x16xf32>
    %116 = arith.mulf %59, %84 : vector<8x16xf32>
    %117 = arith.subf %115, %116 : vector<8x16xf32>
    %cst_29 = arith.constant 7.500000e-01 : f32
    %118 = vector.broadcast %cst_29 : f32 to vector<8x16xf32>
    %119 = arith.mulf %117, %118 : vector<8x16xf32>
    %120 = arith.mulf %55, %84 : vector<8x16xf32>
    %121 = arith.mulf %61, %89 : vector<8x16xf32>
    %122 = arith.subf %120, %121 : vector<8x16xf32>
    %cst_30 = arith.constant 7.500000e-01 : f32
    %123 = vector.broadcast %cst_30 : f32 to vector<8x16xf32>
    %124 = arith.mulf %122, %123 : vector<8x16xf32>
    %125 = arith.mulf %57, %89 : vector<8x16xf32>
    %126 = arith.mulf %63, %94 : vector<8x16xf32>
    %127 = arith.subf %125, %126 : vector<8x16xf32>
    %cst_31 = arith.constant 7.500000e-01 : f32
    %128 = vector.broadcast %cst_31 : f32 to vector<8x16xf32>
    %129 = arith.mulf %127, %128 : vector<8x16xf32>
    %130 = arith.mulf %59, %94 : vector<8x16xf32>
    %131 = arith.mulf %65, %99 : vector<8x16xf32>
    %132 = arith.subf %130, %131 : vector<8x16xf32>
    %cst_32 = arith.constant 7.500000e-01 : f32
    %133 = vector.broadcast %cst_32 : f32 to vector<8x16xf32>
    %134 = arith.mulf %132, %133 : vector<8x16xf32>
    %135 = arith.mulf %61, %99 : vector<8x16xf32>
    %136 = arith.mulf %67, %104 : vector<8x16xf32>
    %137 = arith.subf %135, %136 : vector<8x16xf32>
    %cst_33 = arith.constant 7.500000e-01 : f32
    %138 = vector.broadcast %cst_33 : f32 to vector<8x16xf32>
    %139 = arith.mulf %137, %138 : vector<8x16xf32>
    %140 = arith.mulf %63, %104 : vector<8x16xf32>
    %141 = arith.mulf %69, %109 : vector<8x16xf32>
    %142 = arith.subf %140, %141 : vector<8x16xf32>
    %cst_34 = arith.constant 7.500000e-01 : f32
    %143 = vector.broadcast %cst_34 : f32 to vector<8x16xf32>
    %144 = arith.mulf %142, %143 : vector<8x16xf32>
    %145 = arith.mulf %51, %114 : vector<8x16xf32>
    %146 = arith.mulf %59, %119 : vector<8x16xf32>
    %147 = arith.subf %145, %146 : vector<8x16xf32>
    %cst_35 = arith.constant 5.000000e-01 : f32
    %148 = vector.broadcast %cst_35 : f32 to vector<8x16xf32>
    %149 = arith.mulf %147, %148 : vector<8x16xf32>
    %150 = arith.mulf %53, %119 : vector<8x16xf32>
    %151 = arith.mulf %61, %124 : vector<8x16xf32>
    %152 = arith.subf %150, %151 : vector<8x16xf32>
    %cst_36 = arith.constant 5.000000e-01 : f32
    %153 = vector.broadcast %cst_36 : f32 to vector<8x16xf32>
    %154 = arith.mulf %152, %153 : vector<8x16xf32>
    %155 = arith.mulf %55, %124 : vector<8x16xf32>
    %156 = arith.mulf %63, %129 : vector<8x16xf32>
    %157 = arith.subf %155, %156 : vector<8x16xf32>
    %cst_37 = arith.constant 5.000000e-01 : f32
    %158 = vector.broadcast %cst_37 : f32 to vector<8x16xf32>
    %159 = arith.mulf %157, %158 : vector<8x16xf32>
    %160 = arith.mulf %57, %129 : vector<8x16xf32>
    %161 = arith.mulf %65, %134 : vector<8x16xf32>
    %162 = arith.subf %160, %161 : vector<8x16xf32>
    %cst_38 = arith.constant 5.000000e-01 : f32
    %163 = vector.broadcast %cst_38 : f32 to vector<8x16xf32>
    %164 = arith.mulf %162, %163 : vector<8x16xf32>
    %165 = arith.mulf %59, %134 : vector<8x16xf32>
    %166 = arith.mulf %67, %139 : vector<8x16xf32>
    %167 = arith.subf %165, %166 : vector<8x16xf32>
    %cst_39 = arith.constant 5.000000e-01 : f32
    %168 = vector.broadcast %cst_39 : f32 to vector<8x16xf32>
    %169 = arith.mulf %167, %168 : vector<8x16xf32>
    %170 = arith.mulf %61, %139 : vector<8x16xf32>
    %171 = arith.mulf %69, %144 : vector<8x16xf32>
    %172 = arith.subf %170, %171 : vector<8x16xf32>
    %cst_40 = arith.constant 5.000000e-01 : f32
    %173 = vector.broadcast %cst_40 : f32 to vector<8x16xf32>
    %174 = arith.mulf %172, %173 : vector<8x16xf32>
    %cst_41 = arith.constant 5.000000e-01 : f32
    %175 = vector.broadcast %cst_41 : f32 to vector<8x16xf32>
    %176 = arith.mulf %175, %0 : vector<8x16xf32>
    %177 = math.tanh %176 : vector<8x16xf32>
    %cst_42 = arith.constant 5.000000e-01 : f32
    %178 = vector.broadcast %cst_42 : f32 to vector<8x16xf32>
    %179 = arith.mulf %178, %177 : vector<8x16xf32>
    %cst_43 = arith.constant 5.000000e-01 : f32
    %180 = vector.broadcast %cst_43 : f32 to vector<8x16xf32>
    %181 = arith.addf %179, %180 : vector<8x16xf32>
    %182 = arith.mulf %0, %181 : vector<8x16xf32>
    %183 = tpu.concatenate %182, %149, %154, %159, %164, %169, %174 in 1 : vector<8x16xf32>, vector<8x16xf32>, vector<8x16xf32>, vector<8x16xf32>, vector<8x16xf32>, vector<8x16xf32>, vector<8x16xf32> -> vector<8x112xf32>
    %c0_44 = arith.constant 0 : index
    %c0_45 = arith.constant 0 : index
    %c0_46 = arith.constant 0 : index
    %184 = vector.load %arg2[%c0_44, %c0_45, %c0_46] : memref<4x224x32xf32, #tpu.memory_space<vmem>>, vector<1x112x32xf32>
    %185 = vector.shape_cast %184 : vector<1x112x32xf32> to vector<112x32xf32>
    %cst_47 = arith.constant dense<0.000000e+00> : vector<8x32xf32>
    %186 = tpu.matmul %183, %185, %cst_47 {dimension_numbers = #tpu.dot_dimension_numbers<[1], [0], [0], [1], [0, 0, 1, 1], [], []>} : vector<8x112xf32>, vector<112x32xf32>, vector<8x32xf32> -> vector<8x32xf32>
    %cst_48 = arith.constant -3.000000e+00 : f32
    %187 = vector.broadcast %cst_48 : f32 to vector<8x32xf32>
    %188 = arith.cmpf oge, %186, %187 : vector<8x32xf32>
    %189 = arith.extui %188 : vector<8x32xi1> to vector<8x32xi32>
    %190 = arith.sitofp %189 : vector<8x32xi32> to vector<8x32xf32>
    %cst_49 = arith.constant -2.33333325 : f32
    %191 = vector.broadcast %cst_49 : f32 to vector<8x32xf32>
    %192 = arith.cmpf oge, %186, %191 : vector<8x32xf32>
    %193 = arith.extui %192 : vector<8x32xi1> to vector<8x32xi32>
    %194 = arith.sitofp %193 : vector<8x32xi32> to vector<8x32xf32>
    %cst_50 = arith.constant -1.66666663 : f32
    %195 = vector.broadcast %cst_50 : f32 to vector<8x32xf32>
    %196 = arith.cmpf oge, %186, %195 : vector<8x32xf32>
    %197 = arith.extui %196 : vector<8x32xi1> to vector<8x32xi32>
    %198 = arith.sitofp %197 : vector<8x32xi32> to vector<8x32xf32>
    %cst_51 = arith.constant -1.000000e+00 : f32
    %199 = vector.broadcast %cst_51 : f32 to vector<8x32xf32>
    %200 = arith.cmpf oge, %186, %199 : vector<8x32xf32>
    %201 = arith.extui %200 : vector<8x32xi1> to vector<8x32xi32>
    %202 = arith.sitofp %201 : vector<8x32xi32> to vector<8x32xf32>
    %cst_52 = arith.constant -0.333333343 : f32
    %203 = vector.broadcast %cst_52 : f32 to vector<8x32xf32>
    %204 = arith.cmpf oge, %186, %203 : vector<8x32xf32>
    %205 = arith.extui %204 : vector<8x32xi1> to vector<8x32xi32>
    %206 = arith.sitofp %205 : vector<8x32xi32> to vector<8x32xf32>
    %cst_53 = arith.constant 0.333333343 : f32
    %207 = vector.broadcast %cst_53 : f32 to vector<8x32xf32>
    %208 = arith.cmpf oge, %186, %207 : vector<8x32xf32>
    %209 = arith.extui %208 : vector<8x32xi1> to vector<8x32xi32>
    %210 = arith.sitofp %209 : vector<8x32xi32> to vector<8x32xf32>
    %cst_54 = arith.constant 1.000000e+00 : f32
    %211 = vector.broadcast %cst_54 : f32 to vector<8x32xf32>
    %212 = arith.cmpf oge, %186, %211 : vector<8x32xf32>
    %213 = arith.extui %212 : vector<8x32xi1> to vector<8x32xi32>
    %214 = arith.sitofp %213 : vector<8x32xi32> to vector<8x32xf32>
    %cst_55 = arith.constant 1.66666663 : f32
    %215 = vector.broadcast %cst_55 : f32 to vector<8x32xf32>
    %216 = arith.cmpf oge, %186, %215 : vector<8x32xf32>
    %217 = arith.extui %216 : vector<8x32xi1> to vector<8x32xi32>
    %218 = arith.sitofp %217 : vector<8x32xi32> to vector<8x32xf32>
    %cst_56 = arith.constant 2.33333325 : f32
    %219 = vector.broadcast %cst_56 : f32 to vector<8x32xf32>
    %220 = arith.cmpf oge, %186, %219 : vector<8x32xf32>
    %221 = arith.extui %220 : vector<8x32xi1> to vector<8x32xi32>
    %222 = arith.sitofp %221 : vector<8x32xi32> to vector<8x32xf32>
    %cst_57 = arith.constant 3.000000e+00 : f32
    %223 = vector.broadcast %cst_57 : f32 to vector<8x32xf32>
    %224 = arith.cmpf oge, %186, %223 : vector<8x32xf32>
    %225 = arith.extui %224 : vector<8x32xi1> to vector<8x32xi32>
    %226 = arith.sitofp %225 : vector<8x32xi32> to vector<8x32xf32>
    %227 = arith.subf %190, %194 : vector<8x32xf32>
    %228 = arith.subf %194, %198 : vector<8x32xf32>
    %229 = arith.subf %198, %202 : vector<8x32xf32>
    %230 = arith.subf %202, %206 : vector<8x32xf32>
    %231 = arith.subf %206, %210 : vector<8x32xf32>
    %232 = arith.subf %210, %214 : vector<8x32xf32>
    %233 = arith.subf %214, %218 : vector<8x32xf32>
    %234 = arith.subf %218, %222 : vector<8x32xf32>
    %235 = arith.subf %222, %226 : vector<8x32xf32>
    %cst_58 = arith.constant -3.000000e+00 : f32
    %236 = vector.broadcast %cst_58 : f32 to vector<8x32xf32>
    %237 = arith.subf %186, %236 : vector<8x32xf32>
    %cst_59 = arith.constant -2.33333325 : f32
    %238 = vector.broadcast %cst_59 : f32 to vector<8x32xf32>
    %239 = arith.subf %186, %238 : vector<8x32xf32>
    %cst_60 = arith.constant -1.66666663 : f32
    %240 = vector.broadcast %cst_60 : f32 to vector<8x32xf32>
    %241 = arith.subf %186, %240 : vector<8x32xf32>
    %cst_61 = arith.constant -1.000000e+00 : f32
    %242 = vector.broadcast %cst_61 : f32 to vector<8x32xf32>
    %243 = arith.subf %186, %242 : vector<8x32xf32>
    %cst_62 = arith.constant -0.333333343 : f32
    %244 = vector.broadcast %cst_62 : f32 to vector<8x32xf32>
    %245 = arith.subf %186, %244 : vector<8x32xf32>
    %cst_63 = arith.constant 0.333333343 : f32
    %246 = vector.broadcast %cst_63 : f32 to vector<8x32xf32>
    %247 = arith.subf %186, %246 : vector<8x32xf32>
    %cst_64 = arith.constant 1.000000e+00 : f32
    %248 = vector.broadcast %cst_64 : f32 to vector<8x32xf32>
    %249 = arith.subf %186, %248 : vector<8x32xf32>
    %cst_65 = arith.constant 1.66666663 : f32
    %250 = vector.broadcast %cst_65 : f32 to vector<8x32xf32>
    %251 = arith.subf %186, %250 : vector<8x32xf32>
    %cst_66 = arith.constant 2.33333325 : f32
    %252 = vector.broadcast %cst_66 : f32 to vector<8x32xf32>
    %253 = arith.subf %186, %252 : vector<8x32xf32>
    %cst_67 = arith.constant 3.000000e+00 : f32
    %254 = vector.broadcast %cst_67 : f32 to vector<8x32xf32>
    %255 = arith.subf %186, %254 : vector<8x32xf32>
    %256 = arith.mulf %237, %227 : vector<8x32xf32>
    %257 = arith.mulf %241, %228 : vector<8x32xf32>
    %258 = arith.subf %256, %257 : vector<8x32xf32>
    %cst_68 = arith.constant 1.500000e+00 : f32
    %259 = vector.broadcast %cst_68 : f32 to vector<8x32xf32>
    %260 = arith.mulf %258, %259 : vector<8x32xf32>
    %261 = arith.mulf %239, %228 : vector<8x32xf32>
    %262 = arith.mulf %243, %229 : vector<8x32xf32>
    %263 = arith.subf %261, %262 : vector<8x32xf32>
    %cst_69 = arith.constant 1.500000e+00 : f32
    %264 = vector.broadcast %cst_69 : f32 to vector<8x32xf32>
    %265 = arith.mulf %263, %264 : vector<8x32xf32>
    %266 = arith.mulf %241, %229 : vector<8x32xf32>
    %267 = arith.mulf %245, %230 : vector<8x32xf32>
    %268 = arith.subf %266, %267 : vector<8x32xf32>
    %cst_70 = arith.constant 1.500000e+00 : f32
    %269 = vector.broadcast %cst_70 : f32 to vector<8x32xf32>
    %270 = arith.mulf %268, %269 : vector<8x32xf32>
    %271 = arith.mulf %243, %230 : vector<8x32xf32>
    %272 = arith.mulf %247, %231 : vector<8x32xf32>
    %273 = arith.subf %271, %272 : vector<8x32xf32>
    %cst_71 = arith.constant 1.500000e+00 : f32
    %274 = vector.broadcast %cst_71 : f32 to vector<8x32xf32>
    %275 = arith.mulf %273, %274 : vector<8x32xf32>
    %276 = arith.mulf %245, %231 : vector<8x32xf32>
    %277 = arith.mulf %249, %232 : vector<8x32xf32>
    %278 = arith.subf %276, %277 : vector<8x32xf32>
    %cst_72 = arith.constant 1.500000e+00 : f32
    %279 = vector.broadcast %cst_72 : f32 to vector<8x32xf32>
    %280 = arith.mulf %278, %279 : vector<8x32xf32>
    %281 = arith.mulf %247, %232 : vector<8x32xf32>
    %282 = arith.mulf %251, %233 : vector<8x32xf32>
    %283 = arith.subf %281, %282 : vector<8x32xf32>
    %cst_73 = arith.constant 1.500000e+00 : f32
    %284 = vector.broadcast %cst_73 : f32 to vector<8x32xf32>
    %285 = arith.mulf %283, %284 : vector<8x32xf32>
    %286 = arith.mulf %249, %233 : vector<8x32xf32>
    %287 = arith.mulf %253, %234 : vector<8x32xf32>
    %288 = arith.subf %286, %287 : vector<8x32xf32>
    %cst_74 = arith.constant 1.500000e+00 : f32
    %289 = vector.broadcast %cst_74 : f32 to vector<8x32xf32>
    %290 = arith.mulf %288, %289 : vector<8x32xf32>
    %291 = arith.mulf %251, %234 : vector<8x32xf32>
    %292 = arith.mulf %255, %235 : vector<8x32xf32>
    %293 = arith.subf %291, %292 : vector<8x32xf32>
    %cst_75 = arith.constant 1.500000e+00 : f32
    %294 = vector.broadcast %cst_75 : f32 to vector<8x32xf32>
    %295 = arith.mulf %293, %294 : vector<8x32xf32>
    %296 = arith.mulf %237, %260 : vector<8x32xf32>
    %297 = arith.mulf %243, %265 : vector<8x32xf32>
    %298 = arith.subf %296, %297 : vector<8x32xf32>
    %cst_76 = arith.constant 7.500000e-01 : f32
    %299 = vector.broadcast %cst_76 : f32 to vector<8x32xf32>
    %300 = arith.mulf %298, %299 : vector<8x32xf32>
    %301 = arith.mulf %239, %265 : vector<8x32xf32>
    %302 = arith.mulf %245, %270 : vector<8x32xf32>
    %303 = arith.subf %301, %302 : vector<8x32xf32>
    %cst_77 = arith.constant 7.500000e-01 : f32
    %304 = vector.broadcast %cst_77 : f32 to vector<8x32xf32>
    %305 = arith.mulf %303, %304 : vector<8x32xf32>
    %306 = arith.mulf %241, %270 : vector<8x32xf32>
    %307 = arith.mulf %247, %275 : vector<8x32xf32>
    %308 = arith.subf %306, %307 : vector<8x32xf32>
    %cst_78 = arith.constant 7.500000e-01 : f32
    %309 = vector.broadcast %cst_78 : f32 to vector<8x32xf32>
    %310 = arith.mulf %308, %309 : vector<8x32xf32>
    %311 = arith.mulf %243, %275 : vector<8x32xf32>
    %312 = arith.mulf %249, %280 : vector<8x32xf32>
    %313 = arith.subf %311, %312 : vector<8x32xf32>
    %cst_79 = arith.constant 7.500000e-01 : f32
    %314 = vector.broadcast %cst_79 : f32 to vector<8x32xf32>
    %315 = arith.mulf %313, %314 : vector<8x32xf32>
    %316 = arith.mulf %245, %280 : vector<8x32xf32>
    %317 = arith.mulf %251, %285 : vector<8x32xf32>
    %318 = arith.subf %316, %317 : vector<8x32xf32>
    %cst_80 = arith.constant 7.500000e-01 : f32
    %319 = vector.broadcast %cst_80 : f32 to vector<8x32xf32>
    %320 = arith.mulf %318, %319 : vector<8x32xf32>
    %321 = arith.mulf %247, %285 : vector<8x32xf32>
    %322 = arith.mulf %253, %290 : vector<8x32xf32>
    %323 = arith.subf %321, %322 : vector<8x32xf32>
    %cst_81 = arith.constant 7.500000e-01 : f32
    %324 = vector.broadcast %cst_81 : f32 to vector<8x32xf32>
    %325 = arith.mulf %323, %324 : vector<8x32xf32>
    %326 = arith.mulf %249, %290 : vector<8x32xf32>
    %327 = arith.mulf %255, %295 : vector<8x32xf32>
    %328 = arith.subf %326, %327 : vector<8x32xf32>
    %cst_82 = arith.constant 7.500000e-01 : f32
    %329 = vector.broadcast %cst_82 : f32 to vector<8x32xf32>
    %330 = arith.mulf %328, %329 : vector<8x32xf32>
    %331 = arith.mulf %237, %300 : vector<8x32xf32>
    %332 = arith.mulf %245, %305 : vector<8x32xf32>
    %333 = arith.subf %331, %332 : vector<8x32xf32>
    %cst_83 = arith.constant 5.000000e-01 : f32
    %334 = vector.broadcast %cst_83 : f32 to vector<8x32xf32>
    %335 = arith.mulf %333, %334 : vector<8x32xf32>
    %336 = arith.mulf %239, %305 : vector<8x32xf32>
    %337 = arith.mulf %247, %310 : vector<8x32xf32>
    %338 = arith.subf %336, %337 : vector<8x32xf32>
    %cst_84 = arith.constant 5.000000e-01 : f32
    %339 = vector.broadcast %cst_84 : f32 to vector<8x32xf32>
    %340 = arith.mulf %338, %339 : vector<8x32xf32>
    %341 = arith.mulf %241, %310 : vector<8x32xf32>
    %342 = arith.mulf %249, %315 : vector<8x32xf32>
    %343 = arith.subf %341, %342 : vector<8x32xf32>
    %cst_85 = arith.constant 5.000000e-01 : f32
    %344 = vector.broadcast %cst_85 : f32 to vector<8x32xf32>
    %345 = arith.mulf %343, %344 : vector<8x32xf32>
    %346 = arith.mulf %243, %315 : vector<8x32xf32>
    %347 = arith.mulf %251, %320 : vector<8x32xf32>
    %348 = arith.subf %346, %347 : vector<8x32xf32>
    %cst_86 = arith.constant 5.000000e-01 : f32
    %349 = vector.broadcast %cst_86 : f32 to vector<8x32xf32>
    %350 = arith.mulf %348, %349 : vector<8x32xf32>
    %351 = arith.mulf %245, %320 : vector<8x32xf32>
    %352 = arith.mulf %253, %325 : vector<8x32xf32>
    %353 = arith.subf %351, %352 : vector<8x32xf32>
    %cst_87 = arith.constant 5.000000e-01 : f32
    %354 = vector.broadcast %cst_87 : f32 to vector<8x32xf32>
    %355 = arith.mulf %353, %354 : vector<8x32xf32>
    %356 = arith.mulf %247, %325 : vector<8x32xf32>
    %357 = arith.mulf %255, %330 : vector<8x32xf32>
    %358 = arith.subf %356, %357 : vector<8x32xf32>
    %cst_88 = arith.constant 5.000000e-01 : f32
    %359 = vector.broadcast %cst_88 : f32 to vector<8x32xf32>
    %360 = arith.mulf %358, %359 : vector<8x32xf32>
    %cst_89 = arith.constant 5.000000e-01 : f32
    %361 = vector.broadcast %cst_89 : f32 to vector<8x32xf32>
    %362 = arith.mulf %361, %186 : vector<8x32xf32>
    %363 = math.tanh %362 : vector<8x32xf32>
    %cst_90 = arith.constant 5.000000e-01 : f32
    %364 = vector.broadcast %cst_90 : f32 to vector<8x32xf32>
    %365 = arith.mulf %364, %363 : vector<8x32xf32>
    %cst_91 = arith.constant 5.000000e-01 : f32
    %366 = vector.broadcast %cst_91 : f32 to vector<8x32xf32>
    %367 = arith.addf %365, %366 : vector<8x32xf32>
    %368 = arith.mulf %186, %367 : vector<8x32xf32>
    %369 = tpu.concatenate %368, %335, %340, %345, %350, %355, %360 in 1 : vector<8x32xf32>, vector<8x32xf32>, vector<8x32xf32>, vector<8x32xf32>, vector<8x32xf32>, vector<8x32xf32>, vector<8x32xf32> -> vector<8x224xf32>
    %c1 = arith.constant 1 : index
    %c0_92 = arith.constant 0 : index
    %c0_93 = arith.constant 0 : index
    %370 = vector.load %arg2[%c1, %c0_92, %c0_93] : memref<4x224x32xf32, #tpu.memory_space<vmem>>, vector<1x224x16xf32>
    %371 = vector.shape_cast %370 : vector<1x224x16xf32> to vector<224x16xf32>
    %cst_94 = arith.constant dense<0.000000e+00> : vector<8x16xf32>
    %372 = tpu.matmul %369, %371, %cst_94 {dimension_numbers = #tpu.dot_dimension_numbers<[1], [0], [0], [1], [0, 0, 1, 1], [], []>} : vector<8x224xf32>, vector<224x16xf32>, vector<8x16xf32> -> vector<8x16xf32>
    %cst_95 = arith.constant -3.000000e+00 : f32
    %373 = vector.broadcast %cst_95 : f32 to vector<8x16xf32>
    %374 = arith.cmpf oge, %372, %373 : vector<8x16xf32>
    %375 = arith.extui %374 : vector<8x16xi1> to vector<8x16xi32>
    %376 = arith.sitofp %375 : vector<8x16xi32> to vector<8x16xf32>
    %cst_96 = arith.constant -2.33333325 : f32
    %377 = vector.broadcast %cst_96 : f32 to vector<8x16xf32>
    %378 = arith.cmpf oge, %372, %377 : vector<8x16xf32>
    %379 = arith.extui %378 : vector<8x16xi1> to vector<8x16xi32>
    %380 = arith.sitofp %379 : vector<8x16xi32> to vector<8x16xf32>
    %cst_97 = arith.constant -1.66666663 : f32
    %381 = vector.broadcast %cst_97 : f32 to vector<8x16xf32>
    %382 = arith.cmpf oge, %372, %381 : vector<8x16xf32>
    %383 = arith.extui %382 : vector<8x16xi1> to vector<8x16xi32>
    %384 = arith.sitofp %383 : vector<8x16xi32> to vector<8x16xf32>
    %cst_98 = arith.constant -1.000000e+00 : f32
    %385 = vector.broadcast %cst_98 : f32 to vector<8x16xf32>
    %386 = arith.cmpf oge, %372, %385 : vector<8x16xf32>
    %387 = arith.extui %386 : vector<8x16xi1> to vector<8x16xi32>
    %388 = arith.sitofp %387 : vector<8x16xi32> to vector<8x16xf32>
    %cst_99 = arith.constant -0.333333343 : f32
    %389 = vector.broadcast %cst_99 : f32 to vector<8x16xf32>
    %390 = arith.cmpf oge, %372, %389 : vector<8x16xf32>
    %391 = arith.extui %390 : vector<8x16xi1> to vector<8x16xi32>
    %392 = arith.sitofp %391 : vector<8x16xi32> to vector<8x16xf32>
    %cst_100 = arith.constant 0.333333343 : f32
    %393 = vector.broadcast %cst_100 : f32 to vector<8x16xf32>
    %394 = arith.cmpf oge, %372, %393 : vector<8x16xf32>
    %395 = arith.extui %394 : vector<8x16xi1> to vector<8x16xi32>
    %396 = arith.sitofp %395 : vector<8x16xi32> to vector<8x16xf32>
    %cst_101 = arith.constant 1.000000e+00 : f32
    %397 = vector.broadcast %cst_101 : f32 to vector<8x16xf32>
    %398 = arith.cmpf oge, %372, %397 : vector<8x16xf32>
    %399 = arith.extui %398 : vector<8x16xi1> to vector<8x16xi32>
    %400 = arith.sitofp %399 : vector<8x16xi32> to vector<8x16xf32>
    %cst_102 = arith.constant 1.66666663 : f32
    %401 = vector.broadcast %cst_102 : f32 to vector<8x16xf32>
    %402 = arith.cmpf oge, %372, %401 : vector<8x16xf32>
    %403 = arith.extui %402 : vector<8x16xi1> to vector<8x16xi32>
    %404 = arith.sitofp %403 : vector<8x16xi32> to vector<8x16xf32>
    %cst_103 = arith.constant 2.33333325 : f32
    %405 = vector.broadcast %cst_103 : f32 to vector<8x16xf32>
    %406 = arith.cmpf oge, %372, %405 : vector<8x16xf32>
    %407 = arith.extui %406 : vector<8x16xi1> to vector<8x16xi32>
    %408 = arith.sitofp %407 : vector<8x16xi32> to vector<8x16xf32>
    %cst_104 = arith.constant 3.000000e+00 : f32
    %409 = vector.broadcast %cst_104 : f32 to vector<8x16xf32>
    %410 = arith.cmpf oge, %372, %409 : vector<8x16xf32>
    %411 = arith.extui %410 : vector<8x16xi1> to vector<8x16xi32>
    %412 = arith.sitofp %411 : vector<8x16xi32> to vector<8x16xf32>
    %413 = arith.subf %376, %380 : vector<8x16xf32>
    %414 = arith.subf %380, %384 : vector<8x16xf32>
    %415 = arith.subf %384, %388 : vector<8x16xf32>
    %416 = arith.subf %388, %392 : vector<8x16xf32>
    %417 = arith.subf %392, %396 : vector<8x16xf32>
    %418 = arith.subf %396, %400 : vector<8x16xf32>
    %419 = arith.subf %400, %404 : vector<8x16xf32>
    %420 = arith.subf %404, %408 : vector<8x16xf32>
    %421 = arith.subf %408, %412 : vector<8x16xf32>
    %cst_105 = arith.constant -3.000000e+00 : f32
    %422 = vector.broadcast %cst_105 : f32 to vector<8x16xf32>
    %423 = arith.subf %372, %422 : vector<8x16xf32>
    %cst_106 = arith.constant -2.33333325 : f32
    %424 = vector.broadcast %cst_106 : f32 to vector<8x16xf32>
    %425 = arith.subf %372, %424 : vector<8x16xf32>
    %cst_107 = arith.constant -1.66666663 : f32
    %426 = vector.broadcast %cst_107 : f32 to vector<8x16xf32>
    %427 = arith.subf %372, %426 : vector<8x16xf32>
    %cst_108 = arith.constant -1.000000e+00 : f32
    %428 = vector.broadcast %cst_108 : f32 to vector<8x16xf32>
    %429 = arith.subf %372, %428 : vector<8x16xf32>
    %cst_109 = arith.constant -0.333333343 : f32
    %430 = vector.broadcast %cst_109 : f32 to vector<8x16xf32>
    %431 = arith.subf %372, %430 : vector<8x16xf32>
    %cst_110 = arith.constant 0.333333343 : f32
    %432 = vector.broadcast %cst_110 : f32 to vector<8x16xf32>
    %433 = arith.subf %372, %432 : vector<8x16xf32>
    %cst_111 = arith.constant 1.000000e+00 : f32
    %434 = vector.broadcast %cst_111 : f32 to vector<8x16xf32>
    %435 = arith.subf %372, %434 : vector<8x16xf32>
    %cst_112 = arith.constant 1.66666663 : f32
    %436 = vector.broadcast %cst_112 : f32 to vector<8x16xf32>
    %437 = arith.subf %372, %436 : vector<8x16xf32>
    %cst_113 = arith.constant 2.33333325 : f32
    %438 = vector.broadcast %cst_113 : f32 to vector<8x16xf32>
    %439 = arith.subf %372, %438 : vector<8x16xf32>
    %cst_114 = arith.constant 3.000000e+00 : f32
    %440 = vector.broadcast %cst_114 : f32 to vector<8x16xf32>
    %441 = arith.subf %372, %440 : vector<8x16xf32>
    %442 = arith.mulf %423, %413 : vector<8x16xf32>
    %443 = arith.mulf %427, %414 : vector<8x16xf32>
    %444 = arith.subf %442, %443 : vector<8x16xf32>
    %cst_115 = arith.constant 1.500000e+00 : f32
    %445 = vector.broadcast %cst_115 : f32 to vector<8x16xf32>
    %446 = arith.mulf %444, %445 : vector<8x16xf32>
    %447 = arith.mulf %425, %414 : vector<8x16xf32>
    %448 = arith.mulf %429, %415 : vector<8x16xf32>
    %449 = arith.subf %447, %448 : vector<8x16xf32>
    %cst_116 = arith.constant 1.500000e+00 : f32
    %450 = vector.broadcast %cst_116 : f32 to vector<8x16xf32>
    %451 = arith.mulf %449, %450 : vector<8x16xf32>
    %452 = arith.mulf %427, %415 : vector<8x16xf32>
    %453 = arith.mulf %431, %416 : vector<8x16xf32>
    %454 = arith.subf %452, %453 : vector<8x16xf32>
    %cst_117 = arith.constant 1.500000e+00 : f32
    %455 = vector.broadcast %cst_117 : f32 to vector<8x16xf32>
    %456 = arith.mulf %454, %455 : vector<8x16xf32>
    %457 = arith.mulf %429, %416 : vector<8x16xf32>
    %458 = arith.mulf %433, %417 : vector<8x16xf32>
    %459 = arith.subf %457, %458 : vector<8x16xf32>
    %cst_118 = arith.constant 1.500000e+00 : f32
    %460 = vector.broadcast %cst_118 : f32 to vector<8x16xf32>
    %461 = arith.mulf %459, %460 : vector<8x16xf32>
    %462 = arith.mulf %431, %417 : vector<8x16xf32>
    %463 = arith.mulf %435, %418 : vector<8x16xf32>
    %464 = arith.subf %462, %463 : vector<8x16xf32>
    %cst_119 = arith.constant 1.500000e+00 : f32
    %465 = vector.broadcast %cst_119 : f32 to vector<8x16xf32>
    %466 = arith.mulf %464, %465 : vector<8x16xf32>
    %467 = arith.mulf %433, %418 : vector<8x16xf32>
    %468 = arith.mulf %437, %419 : vector<8x16xf32>
    %469 = arith.subf %467, %468 : vector<8x16xf32>
    %cst_120 = arith.constant 1.500000e+00 : f32
    %470 = vector.broadcast %cst_120 : f32 to vector<8x16xf32>
    %471 = arith.mulf %469, %470 : vector<8x16xf32>
    %472 = arith.mulf %435, %419 : vector<8x16xf32>
    %473 = arith.mulf %439, %420 : vector<8x16xf32>
    %474 = arith.subf %472, %473 : vector<8x16xf32>
    %cst_121 = arith.constant 1.500000e+00 : f32
    %475 = vector.broadcast %cst_121 : f32 to vector<8x16xf32>
    %476 = arith.mulf %474, %475 : vector<8x16xf32>
    %477 = arith.mulf %437, %420 : vector<8x16xf32>
    %478 = arith.mulf %441, %421 : vector<8x16xf32>
    %479 = arith.subf %477, %478 : vector<8x16xf32>
    %cst_122 = arith.constant 1.500000e+00 : f32
    %480 = vector.broadcast %cst_122 : f32 to vector<8x16xf32>
    %481 = arith.mulf %479, %480 : vector<8x16xf32>
    %482 = arith.mulf %423, %446 : vector<8x16xf32>
    %483 = arith.mulf %429, %451 : vector<8x16xf32>
    %484 = arith.subf %482, %483 : vector<8x16xf32>
    %cst_123 = arith.constant 7.500000e-01 : f32
    %485 = vector.broadcast %cst_123 : f32 to vector<8x16xf32>
    %486 = arith.mulf %484, %485 : vector<8x16xf32>
    %487 = arith.mulf %425, %451 : vector<8x16xf32>
    %488 = arith.mulf %431, %456 : vector<8x16xf32>
    %489 = arith.subf %487, %488 : vector<8x16xf32>
    %cst_124 = arith.constant 7.500000e-01 : f32
    %490 = vector.broadcast %cst_124 : f32 to vector<8x16xf32>
    %491 = arith.mulf %489, %490 : vector<8x16xf32>
    %492 = arith.mulf %427, %456 : vector<8x16xf32>
    %493 = arith.mulf %433, %461 : vector<8x16xf32>
    %494 = arith.subf %492, %493 : vector<8x16xf32>
    %cst_125 = arith.constant 7.500000e-01 : f32
    %495 = vector.broadcast %cst_125 : f32 to vector<8x16xf32>
    %496 = arith.mulf %494, %495 : vector<8x16xf32>
    %497 = arith.mulf %429, %461 : vector<8x16xf32>
    %498 = arith.mulf %435, %466 : vector<8x16xf32>
    %499 = arith.subf %497, %498 : vector<8x16xf32>
    %cst_126 = arith.constant 7.500000e-01 : f32
    %500 = vector.broadcast %cst_126 : f32 to vector<8x16xf32>
    %501 = arith.mulf %499, %500 : vector<8x16xf32>
    %502 = arith.mulf %431, %466 : vector<8x16xf32>
    %503 = arith.mulf %437, %471 : vector<8x16xf32>
    %504 = arith.subf %502, %503 : vector<8x16xf32>
    %cst_127 = arith.constant 7.500000e-01 : f32
    %505 = vector.broadcast %cst_127 : f32 to vector<8x16xf32>
    %506 = arith.mulf %504, %505 : vector<8x16xf32>
    %507 = arith.mulf %433, %471 : vector<8x16xf32>
    %508 = arith.mulf %439, %476 : vector<8x16xf32>
    %509 = arith.subf %507, %508 : vector<8x16xf32>
    %cst_128 = arith.constant 7.500000e-01 : f32
    %510 = vector.broadcast %cst_128 : f32 to vector<8x16xf32>
    %511 = arith.mulf %509, %510 : vector<8x16xf32>
    %512 = arith.mulf %435, %476 : vector<8x16xf32>
    %513 = arith.mulf %441, %481 : vector<8x16xf32>
    %514 = arith.subf %512, %513 : vector<8x16xf32>
    %cst_129 = arith.constant 7.500000e-01 : f32
    %515 = vector.broadcast %cst_129 : f32 to vector<8x16xf32>
    %516 = arith.mulf %514, %515 : vector<8x16xf32>
    %517 = arith.mulf %423, %486 : vector<8x16xf32>
    %518 = arith.mulf %431, %491 : vector<8x16xf32>
    %519 = arith.subf %517, %518 : vector<8x16xf32>
    %cst_130 = arith.constant 5.000000e-01 : f32
    %520 = vector.broadcast %cst_130 : f32 to vector<8x16xf32>
    %521 = arith.mulf %519, %520 : vector<8x16xf32>
    %522 = arith.mulf %425, %491 : vector<8x16xf32>
    %523 = arith.mulf %433, %496 : vector<8x16xf32>
    %524 = arith.subf %522, %523 : vector<8x16xf32>
    %cst_131 = arith.constant 5.000000e-01 : f32
    %525 = vector.broadcast %cst_131 : f32 to vector<8x16xf32>
    %526 = arith.mulf %524, %525 : vector<8x16xf32>
    %527 = arith.mulf %427, %496 : vector<8x16xf32>
    %528 = arith.mulf %435, %501 : vector<8x16xf32>
    %529 = arith.subf %527, %528 : vector<8x16xf32>
    %cst_132 = arith.constant 5.000000e-01 : f32
    %530 = vector.broadcast %cst_132 : f32 to vector<8x16xf32>
    %531 = arith.mulf %529, %530 : vector<8x16xf32>
    %532 = arith.mulf %429, %501 : vector<8x16xf32>
    %533 = arith.mulf %437, %506 : vector<8x16xf32>
    %534 = arith.subf %532, %533 : vector<8x16xf32>
    %cst_133 = arith.constant 5.000000e-01 : f32
    %535 = vector.broadcast %cst_133 : f32 to vector<8x16xf32>
    %536 = arith.mulf %534, %535 : vector<8x16xf32>
    %537 = arith.mulf %431, %506 : vector<8x16xf32>
    %538 = arith.mulf %439, %511 : vector<8x16xf32>
    %539 = arith.subf %537, %538 : vector<8x16xf32>
    %cst_134 = arith.constant 5.000000e-01 : f32
    %540 = vector.broadcast %cst_134 : f32 to vector<8x16xf32>
    %541 = arith.mulf %539, %540 : vector<8x16xf32>
    %542 = arith.mulf %433, %511 : vector<8x16xf32>
    %543 = arith.mulf %441, %516 : vector<8x16xf32>
    %544 = arith.subf %542, %543 : vector<8x16xf32>
    %cst_135 = arith.constant 5.000000e-01 : f32
    %545 = vector.broadcast %cst_135 : f32 to vector<8x16xf32>
    %546 = arith.mulf %544, %545 : vector<8x16xf32>
    %cst_136 = arith.constant 5.000000e-01 : f32
    %547 = vector.broadcast %cst_136 : f32 to vector<8x16xf32>
    %548 = arith.mulf %547, %372 : vector<8x16xf32>
    %549 = math.tanh %548 : vector<8x16xf32>
    %cst_137 = arith.constant 5.000000e-01 : f32
    %550 = vector.broadcast %cst_137 : f32 to vector<8x16xf32>
    %551 = arith.mulf %550, %549 : vector<8x16xf32>
    %cst_138 = arith.constant 5.000000e-01 : f32
    %552 = vector.broadcast %cst_138 : f32 to vector<8x16xf32>
    %553 = arith.addf %551, %552 : vector<8x16xf32>
    %554 = arith.mulf %372, %553 : vector<8x16xf32>
    %555 = tpu.concatenate %554, %521, %526, %531, %536, %541, %546 in 1 : vector<8x16xf32>, vector<8x16xf32>, vector<8x16xf32>, vector<8x16xf32>, vector<8x16xf32>, vector<8x16xf32>, vector<8x16xf32> -> vector<8x112xf32>
    %c2 = arith.constant 2 : index
    %c0_139 = arith.constant 0 : index
    %c0_140 = arith.constant 0 : index
    %556 = vector.load %arg2[%c2, %c0_139, %c0_140] : memref<4x224x32xf32, #tpu.memory_space<vmem>>, vector<1x112x8xf32>
    %557 = vector.shape_cast %556 : vector<1x112x8xf32> to vector<112x8xf32>
    %cst_141 = arith.constant dense<0.000000e+00> : vector<8x8xf32>
    %558 = tpu.matmul %555, %557, %cst_141 {dimension_numbers = #tpu.dot_dimension_numbers<[1], [0], [0], [1], [0, 0, 1, 1], [], []>} : vector<8x112xf32>, vector<112x8xf32>, vector<8x8xf32> -> vector<8x8xf32>
    %c3 = arith.constant 3 : index
    %c0_142 = arith.constant 0 : index
    %c0_143 = arith.constant 0 : index
    %559 = vector.load %arg2[%c3, %c0_142, %c0_143] : memref<4x224x32xf32, #tpu.memory_space<vmem>>, vector<1x8x8xf32>
    %560 = vector.shape_cast %559 : vector<1x8x8xf32> to vector<8x8xf32>
    %c3_144 = arith.constant 3 : index
    %c8 = arith.constant 8 : index
    %c0_145 = arith.constant 0 : index
    %561 = vector.load %arg2[%c3_144, %c8, %c0_145] : memref<4x224x32xf32, #tpu.memory_space<vmem>>, vector<1x8x8xf32>
    %562 = vector.shape_cast %561 : vector<1x8x8xf32> to vector<8x8xf32>
    %c0_146 = arith.constant 0 : index
    %c0_147 = arith.constant 0 : index
    %563 = vector.load %arg3[%c0_146, %c0_147] : memref<2x8xf32, #tpu.memory_space<vmem>>, vector<2x8xf32>
    %cst_148 = arith.constant dense<0.000000e+00> : vector<8x8xf32>
    %564 = tpu.matmul %558, %560, %cst_148 {dimension_numbers = #tpu.dot_dimension_numbers<[1], [0], [0], [1], [0, 0, 1, 1], [], []>} : vector<8x8xf32>, vector<8x8xf32>, vector<8x8xf32> -> vector<8x8xf32>
    %565 = vector.extract_strided_slice %563 {offsets = [0, 0], sizes = [1, 8], strides = [1, 1]} : vector<2x8xf32> to vector<1x8xf32>
    %566 = vector.broadcast %565 : vector<1x8xf32> to vector<8x8xf32>
    %567 = arith.addf %564, %566 : vector<8x8xf32>
    %cst_149 = arith.constant dense<0.000000e+00> : vector<8x8xf32>
    %568 = tpu.matmul %558, %562, %cst_149 {dimension_numbers = #tpu.dot_dimension_numbers<[1], [0], [0], [1], [0, 0, 1, 1], [], []>} : vector<8x8xf32>, vector<8x8xf32>, vector<8x8xf32> -> vector<8x8xf32>
    %569 = vector.extract_strided_slice %563 {offsets = [1, 0], sizes = [1, 8], strides = [1, 1]} : vector<2x8xf32> to vector<1x8xf32>
    %570 = vector.broadcast %569 : vector<1x8xf32> to vector<8x8xf32>
    %571 = arith.addf %568, %570 : vector<8x8xf32>
    %c0_150 = arith.constant 0 : index
    %c0_151 = arith.constant 0 : index
    %572 = vector.load %arg4[%c0_150, %c0_151] : memref<8x8xf32, #tpu.memory_space<vmem>>, vector<8x8xf32>
    tpu.vector_store %arg4[%c0_150, %c0_151], %567 {strides = array<i32>} : memref<8x8xf32, #tpu.memory_space<vmem>>, vector<8x8xf32>,
    %c0_152 = arith.constant 0 : index
    %c0_153 = arith.constant 0 : index
    %573 = vector.load %arg5[%c0_152, %c0_153] : memref<8x8xf32, #tpu.memory_space<vmem>>, vector<8x8xf32>
    tpu.vector_store %arg5[%c0_152, %c0_153], %571 {strides = array<i32>} : memref<8x8xf32, #tpu.memory_space<vmem>>, vector<8x8xf32>,
    %cst_154 = arith.constant 5.000000e-01 : f32
    %574 = vector.broadcast %cst_154 : f32 to vector<8x8xf32>
    %575 = arith.mulf %574, %571 : vector<8x8xf32>
    %576 = math.exp %575 : vector<8x8xf32>
    %c0_155 = arith.constant 0 : index
    %c0_156 = arith.constant 0 : index
    %577 = vector.load %arg6[%c0_155, %c0_156] : memref<8x8xf32, #tpu.memory_space<vmem>>, vector<8x8xf32>
    tpu.vector_store %arg6[%c0_155, %c0_156], %576 {strides = array<i32>} : memref<8x8xf32, #tpu.memory_space<vmem>>, vector<8x8xf32>,
    return
  }
  func.func @transform_0(%arg0: i32) -> (i32, i32) {
    %c0_i32 = arith.constant 0 : i32
    %c0_i32_0 = arith.constant 0 : i32
    return %arg0, %c0_i32 : i32, i32
  }
  func.func @transform_1(%arg0: i32) -> (i32, i32, i32) {
    %c0_i32 = arith.constant 0 : i32
    %c0_i32_0 = arith.constant 0 : i32
    %c0_i32_1 = arith.constant 0 : i32
    %c0_i32_2 = arith.constant 0 : i32
    return %c0_i32, %c0_i32_0, %c0_i32_1 : i32, i32, i32
  }
  func.func @transform_2(%arg0: i32) -> (i32, i32) {
    %c0_i32 = arith.constant 0 : i32
    %c0_i32_0 = arith.constant 0 : i32
    %c0_i32_1 = arith.constant 0 : i32
    return %c0_i32, %c0_i32_0 : i32, i32
  }
  func.func @transform_3(%arg0: i32) -> (i32, i32) {
    %c0_i32 = arith.constant 0 : i32
    %c0_i32_0 = arith.constant 0 : i32
    return %arg0, %c0_i32 : i32, i32
  }
  func.func @transform_4(%arg0: i32) -> (i32, i32) {
    %c0_i32 = arith.constant 0 : i32
    %c0_i32_0 = arith.constant 0 : i32
    return %arg0, %c0_i32 : i32, i32
  }
  func.func @transform_5(%arg0: i32) -> (i32, i32) {
    %c0_i32 = arith.constant 0 : i32
    %c0_i32_0 = arith.constant 0 : i32
    return %arg0, %c0_i32 : i32, i32
  }
}

</mosaic_0001>

<llo_original>
// kernel: tpu_custom_call.1
$region0: #{tpu_custom_call.1}
  #allocation0 [shape = 'u32[]', space=smem, size = 0x4, offset = 0x4, fixed_abs, tag = 'smem constant byte address 0x4 - core index']
  #allocation1 [shape = 'u32[144,128]{1,0:T(1,128)}', space=vmem, size = 0x12000, scoped, tag = 'internal scratch']
  %s0 = inlined_call_operand.vmem [shape: f32[8,16], index: 0, kind: input, shape index: {}]
  %s1 = inlined_call_operand.vmem [shape: f32[4,224,32], index: 1, kind: input, shape index: {}]
  %s2 = inlined_call_operand.vmem [shape: f32[2,8], index: 2, kind: input, shape index: {}]
  %s3 = inlined_call_operand.hbm [shape: f32[8,8], index: 3, kind: output, shape index: {0}]
  %s4 = inlined_call_operand.hbm [shape: f32[8,8], index: 4, kind: output, shape index: {1}]
  %s5 = inlined_call_operand.hbm [shape: f32[8,8], index: 5, kind: output, shape index: {2}]
  %6 = xla_tuple %s3, %s4, %s5
  %s7 = sld [smem:[#allocation0]]
  $region38: #{tpu_custom_call.1} parent=0
    _
  %s9 = ssub.s32 1, %s7
  %s10 = scalar_select 0, %s9, %s7
  $region1: #{tpu_custom_call.1} parent=0
    #allocation2 [shape = 'u8[4096]{0}', space=vmem, size = 0x1000, scoped, tag = 'output window, operand 0, single buffered']
    #allocation3 [shape = 's32[1]{0}', space=sflag, size = 0x4, scoped, tag = 'scoped memory for tpu_custom_call.1']
    #allocation4 [shape = 'u8[4096]{0}', space=vmem, size = 0x1000, scoped, tag = 'output window, operand 1, single buffered']
    #allocation5 [shape = 's32[1]{0}', space=sflag, size = 0x4, scoped, tag = 'scoped memory for tpu_custom_call.1']
    #allocation6 [shape = 'u8[4096]{0}', space=vmem, size = 0x1000, scoped, tag = 'output window, operand 2, single buffered']
    %11 = vsyncpa [#allocation3], 0
    %12 = vsyncpa [#allocation5], 0
    // Predicated region
    $region2: #{tpu_custom_call.1} parent=1 // pred_check
      _
    $region3: #{tpu_custom_call.1} parent=1 // pred_check_branch
      %14 = sbr.rel (0) target = $region5
    $region4: #{tpu_custom_call.1} parent=1 // pred_region
      _
    $region5: #{tpu_custom_call.1} parent=1 // pred_fallthru
      _
    // Predicated region
    $region6: #{tpu_custom_call.1} parent=1 // pred_check
      _
    $region7: #{tpu_custom_call.1} parent=1 // pred_check_branch
      %16 = sbr.rel (0) target = $region9
    $region8: #{tpu_custom_call.1} parent=1 // pred_region
      _
    $region9: #{tpu_custom_call.1} parent=1 // pred_fallthru
      _
    // Predicated region
    $region10: #{tpu_custom_call.1} parent=1 // pred_check
      _
    $region11: #{tpu_custom_call.1} parent=1 // pred_check_branch
      %18 = sbr.rel (0) target = $region13
    $region12: #{tpu_custom_call.1} parent=1 // pred_region
      _
    $region13: #{tpu_custom_call.1} parent=1 // pred_fallthru
      _
    %v19 = vld [vmem:[%s0] sm:$0xff]
    %vm20 = vcmp.ge.f32.partialorder %v19, -3.0
    %v21 = vsel %vm20, 1, 0
    %v22 = vcvt.s32.f32 %v21
    %vm23 = vcmp.ge.f32.partialorder %v19, -2.3333333
    %v24 = vsel %vm23, 1, 0
    %v25 = vcvt.s32.f32 %v24
    %vm26 = vcmp.ge.f32.partialorder %v19, -1.6666666
    %v27 = vsel %vm26, 1, 0
    %v28 = vcvt.s32.f32 %v27
    %vm29 = vcmp.ge.f32.partialorder %v19, -1.0
    %v30 = vsel %vm29, 1, 0
    %v31 = vcvt.s32.f32 %v30
    %vm32 = vcmp.ge.f32.partialorder %v19, -0.33333334
    %v33 = vsel %vm32, 1, 0
    %v34 = vcvt.s32.f32 %v33
    %vm35 = vcmp.ge.f32.partialorder %v19, 0.33333334
    %v36 = vsel %vm35, 1, 0
    %v37 = vcvt.s32.f32 %v36
    %vm38 = vcmp.ge.f32.partialorder %v19, 1.0
    %v39 = vsel %vm38, 1, 0
    %v40 = vcvt.s32.f32 %v39
    %vm41 = vcmp.ge.f32.partialorder %v19, 1.6666666
    %v42 = vsel %vm41, 1, 0
    %v43 = vcvt.s32.f32 %v42
    %vm44 = vcmp.ge.f32.partialorder %v19, 2.3333333
    %v45 = vsel %vm44, 1, 0
    %v46 = vcvt.s32.f32 %v45
    %vm47 = vcmp.ge.f32.partialorder %v19, 3.0
    %v48 = vsel %vm47, 1, 0
    %v49 = vcvt.s32.f32 %v48
    %v50 = vsub.f32 %v22, %v25
    %v51 = vsub.f32 %v25, %v28
    %v52 = vsub.f32 %v28, %v31
    %v53 = vsub.f32 %v31, %v34
    %v54 = vsub.f32 %v34, %v37
    %v55 = vsub.f32 %v37, %v40
    %v56 = vsub.f32 %v40, %v43
    %v57 = vsub.f32 %v43, %v46
    %v58 = vsub.f32 %v46, %v49
    %v59 = vsub.f32 %v19, -3.0
    %v60 = vsub.f32 %v19, -2.3333333
    %v61 = vsub.f32 %v19, -1.6666666
    %v62 = vsub.f32 %v19, -1.0
    %v63 = vsub.f32 %v19, -0.33333334
    %v64 = vsub.f32 %v19, 0.33333334
    %v65 = vsub.f32 %v19, 1.0
    %v66 = vsub.f32 %v19, 1.6666666
    %v67 = vsub.f32 %v19, 2.3333333
    %v68 = vsub.f32 %v19, 3.0
    %v69 = vmul.f32 %v59, %v50
    %v70 = vmul.f32 %v61, %v51
    %v71 = vsub.f32 %v69, %v70
    %v72 = vmul.f32 %v71, 1.5
    %v73 = vmul.f32 %v60, %v51
    %v74 = vmul.f32 %v62, %v52
    %v75 = vsub.f32 %v73, %v74
    %v76 = vmul.f32 %v75, 1.5
    %v77 = vmul.f32 %v61, %v52
    %v78 = vmul.f32 %v63, %v53
    %v79 = vsub.f32 %v77, %v78
    %v80 = vmul.f32 %v79, 1.5
    %v81 = vmul.f32 %v62, %v53
    %v82 = vmul.f32 %v64, %v54
    %v83 = vsub.f32 %v81, %v82
    %v84 = vmul.f32 %v83, 1.5
    %v85 = vmul.f32 %v63, %v54
    %v86 = vmul.f32 %v65, %v55
    %v87 = vsub.f32 %v85, %v86
    %v88 = vmul.f32 %v87, 1.5
    %v89 = vmul.f32 %v64, %v55
    %v90 = vmul.f32 %v66, %v56
    %v91 = vsub.f32 %v89, %v90
    %v92 = vmul.f32 %v91, 1.5
    %v93 = vmul.f32 %v65, %v56
    %v94 = vmul.f32 %v67, %v57
    %v95 = vsub.f32 %v93, %v94
    %v96 = vmul.f32 %v95, 1.5
    %v97 = vmul.f32 %v66, %v57
    %v98 = vmul.f32 %v68, %v58
    %v99 = vsub.f32 %v97, %v98
    %v100 = vmul.f32 %v99, 1.5
    %v101 = vmul.f32 %v59, %v72
    %v102 = vmul.f32 %v62, %v76
    %v103 = vsub.f32 %v101, %v102
    %v104 = vmul.f32 %v103, 0.75
    %v105 = vmul.f32 %v60, %v76
    %v106 = vmul.f32 %v63, %v80
    %v107 = vsub.f32 %v105, %v106
    %v108 = vmul.f32 %v107, 0.75
    %v109 = vmul.f32 %v61, %v80
    %v110 = vmul.f32 %v64, %v84
    %v111 = vsub.f32 %v109, %v110
    %v112 = vmul.f32 %v111, 0.75
    %v113 = vmul.f32 %v62, %v84
    %v114 = vmul.f32 %v65, %v88
    %v115 = vsub.f32 %v113, %v114
    %v116 = vmul.f32 %v115, 0.75
    %v117 = vmul.f32 %v63, %v88
    %v118 = vmul.f32 %v66, %v92
    %v119 = vsub.f32 %v117, %v118
    %v120 = vmul.f32 %v119, 0.75
    %v121 = vmul.f32 %v64, %v92
    %v122 = vmul.f32 %v67, %v96
    %v123 = vsub.f32 %v121, %v122
    %v124 = vmul.f32 %v123, 0.75
    %v125 = vmul.f32 %v65, %v96
    %v126 = vmul.f32 %v68, %v100
    %v127 = vsub.f32 %v125, %v126
    %v128 = vmul.f32 %v127, 0.75
    %v129 = vmul.f32 %v59, %v104
    %v130 = vmul.f32 %v63, %v108
    %v131 = vsub.f32 %v129, %v130
    %v132 = vmul.f32 %v131, 0.5
    %v133 = vmul.f32 %v60, %v108
    %v134 = vmul.f32 %v64, %v112
    %v135 = vsub.f32 %v133, %v134
    %v136 = vmul.f32 %v135, 0.5
    %v137 = vmul.f32 %v61, %v112
    %v138 = vmul.f32 %v65, %v116
    %v139 = vsub.f32 %v137, %v138
    %v140 = vmul.f32 %v139, 0.5
    %v141 = vmul.f32 %v62, %v116
    %v142 = vmul.f32 %v66, %v120
    %v143 = vsub.f32 %v141, %v142
    %v144 = vmul.f32 %v143, 0.5
    %v145 = vmul.f32 %v63, %v120
    %v146 = vmul.f32 %v67, %v124
    %v147 = vsub.f32 %v145, %v146
    %v148 = vmul.f32 %v147, 0.5
    %v149 = vmul.f32 %v64, %v124
    %v150 = vmul.f32 %v68, %v128
    %v151 = vsub.f32 %v149, %v150
    %v152 = vmul.f32 %v151, 0.5
    %v153 = vmul.f32 %v19, 0.5
    %v154 = vtanh.pop %v153
    %v155 = vmul.f32 %v154, 0.5
    %v156 = vadd.f32 %v155, 0.5
    %v157 = vmul.f32 %v19, %v156
    %159 = vrot.lane.b32.xlu0 %v132, 16
    %v160 = vpop.permute.xlu0 %159
    %163 = vrot.lane.b32.xlu0 %v136, 32
    %v164 = vpop.permute.xlu0 %163
    %167 = vrot.lane.b32.xlu0 %v140, 48
    %v168 = vpop.permute.xlu0 %167
    %171 = vrot.lane.b32.xlu0 %v144, 64
    %v172 = vpop.permute.xlu0 %171
    %175 = vrot.lane.b32.xlu0 %v148, 80
    %v176 = vpop.permute.xlu0 %175
    %179 = vrot.lane.b32.xlu0 %v152, 96
    %v180 = vpop.permute.xlu0 %179
    %vm182 = vcmask 130048
    %v183 = vsel %vm182, %v157, %v160
    %vm184 = vcmask 261120
    %v185 = vsel %vm184, %v183, %v164
    %vm186 = vcmask 392192
    %v187 = vsel %vm186, %v185, %v168
    %vm188 = vcmask 523264
    %v189 = vsel %vm188, %v187, %v172
    %vm190 = vcmask 654336
    %v191 = vsel %vm190, %v189, %v176
    %vm192 = vcmask 785408
    %v193 = vsel %vm192, %v191, %v180
    %v194 = vld [vmem:[%s1] sm:$0xff]
    %v195 = vld [vmem:[%s1 + $0x8] sm:$0xff]
    %v196 = vld [vmem:[%s1 + $0x10] sm:$0xff]
    %v197 = vld [vmem:[%s1 + $0x18] sm:$0xff]
    %v198 = vld [vmem:[%s1 + $0x20] sm:$0xff]
    %v199 = vld [vmem:[%s1 + $0x28] sm:$0xff]
    %v200 = vld [vmem:[%s1 + $0x30] sm:$0xff]
    %v201 = vld [vmem:[%s1 + $0x38] sm:$0xff]
    %v202 = vld [vmem:[%s1 + $0x40] sm:$0xff]
    %v203 = vld [vmem:[%s1 + $0x48] sm:$0xff]
    %v204 = vld [vmem:[%s1 + $0x50] sm:$0xff]
    %v205 = vld [vmem:[%s1 + $0x58] sm:$0xff]
    %v206 = vld [vmem:[%s1 + $0x60] sm:$0xff]
    %v207 = vld [vmem:[%s1 + $0x68] sm:$0xff]
    %vm208 = vcmask 916480
    %v210 = vsel %vm208, %v193, 0
    %212 = vmatprep.subr.mxu0 0.0
    %213 = vmatpush1.msra.mxu0 %v194
    %214 = vmatprep.subr.mxu0 0.0
    %215 = vmatpush1.msra.mxu0 %v195
    %216 = vmatprep.subr.mxu0 0.0
    %217 = vmatpush1.msra.mxu0 %v196
    %218 = vmatprep.subr.mxu0 0.0
    %219 = vmatpush1.msra.mxu0 %v197
    %220 = vmatprep.subr.mxu0 0.0
    %221 = vmatpush1.msra.mxu0 %v198
    %222 = vmatprep.subr.mxu0 0.0
    %223 = vmatpush1.msra.mxu0 %v199
    %224 = vmatprep.subr.mxu0 0.0
    %225 = vmatpush1.msra.mxu0 %v200
    %226 = vmatprep.subr.mxu0 0.0
    %227 = vmatpush1.msra.mxu0 %v201
    %228 = vmatprep.subr.mxu0 0.0
    %229 = vmatpush1.msra.mxu0 %v202
    %230 = vmatprep.subr.mxu0 0.0
    %231 = vmatpush1.msra.mxu0 %v203
    %232 = vmatprep.subr.mxu0 0.0
    %233 = vmatpush1.msra.mxu0 %v204
    %234 = vmatprep.subr.mxu0 0.0
    %235 = vmatpush1.msra.mxu0 %v205
    %236 = vmatprep.subr.mxu0 0.0
    %237 = vmatpush1.msra.mxu0 %v206
    %238 = vmatprep.subr.mxu0 0.0
    %239 = vmatpush1.msra.mxu0 %v207
    %240 = vmatprep.subr.mxu0 0.0
    %241 = vmatpush1.msra.mxu0 0.0
    %242 = vmatprep.subr.mxu0 0.0
    %243 = vmatpush1.msra.mxu0 0.0
    %244 = vmatprep.subr.mxu0 0.0
    %245 = vmatpush1.msra.mxu0 0.0
    %246 = vmatprep.subr.mxu0 0.0
    %247 = vmatpush1.msra.mxu0 0.0
    %248 = vmatprep.subr.mxu0 0.0
    %249 = vmatpush1.msra.mxu0 0.0
    %250 = vmatprep.subr.mxu0 0.0
    %251 = vmatpush1.msra.mxu0 0.0
    %252 = vmatprep.subr.mxu0 0.0
    %253 = vmatpush1.msra.mxu0 0.0
    %254 = vmatprep.subr.mxu0 0.0
    %255 = vmatpush1.msra.mxu0 0.0
    %256 = vmatprep.subr.mxu0 0.0
    %257 = vmatpush1.msra.mxu0 0.0
    %258 = vmatprep.subr.mxu0 0.0
    %259 = vmatpush1.msra.mxu0 0.0
    %260 = vmatprep.subr.mxu0 0.0
    %261 = vmatpush1.msra.mxu0 0.0
    %262 = vmatprep.subr.mxu0 0.0
    %263 = vmatpush1.msra.mxu0 0.0
    %264 = vmatprep.subr.mxu0 0.0
    %265 = vmatpush1.msra.mxu0 0.0
    %266 = vmatprep.subr.mxu0 0.0
    %267 = vmatpush1.msra.mxu0 0.0
    %268 = vmatprep.subr.mxu0 0.0
    %269 = vmatpush1.msra.mxu0 0.0
    %270 = vmatprep.subr.mxu0 0.0
    %271 = vmatpush1.msra.mxu0 0.0
    %272 = vmatprep.subr.mxu0 0.0
    %273 = vmatpush1.msra.mxu0 0.0
    %274 = vmatprep.subr.mxu0 0.0
    %275 = vmatpush1.msra.mxu0 0.0
    %276 = vmatprep.mubr.f32.mxu0 0.0
    %277 = vmatmul.mubr.f32.gmra.mrb[0].mxu0 %v210
    %v278 = vpop.f32.mrb[0].mxu0
    %v279 = vadd.f32 0.0, %v278
    %v280 = vpop.f32.mrb[0].mxu0
    %281 = vdwg.mxu0
    %vm282 = vcmp.ge.f32.partialorder %v279, -3.0
    %v283 = vsel %vm282, 1, 0
    %v284 = vcvt.s32.f32 %v283
    %vm285 = vcmp.ge.f32.partialorder %v279, -2.3333333
    %v286 = vsel %vm285, 1, 0
    %v287 = vcvt.s32.f32 %v286
    %vm288 = vcmp.ge.f32.partialorder %v279, -1.6666666
    %v289 = vsel %vm288, 1, 0
    %v290 = vcvt.s32.f32 %v289
    %vm291 = vcmp.ge.f32.partialorder %v279, -1.0
    %v292 = vsel %vm291, 1, 0
    %v293 = vcvt.s32.f32 %v292
    %vm294 = vcmp.ge.f32.partialorder %v279, -0.33333334
    %v295 = vsel %vm294, 1, 0
    %v296 = vcvt.s32.f32 %v295
    %vm297 = vcmp.ge.f32.partialorder %v279, 0.33333334
    %v298 = vsel %vm297, 1, 0
    %v299 = vcvt.s32.f32 %v298
    %vm300 = vcmp.ge.f32.partialorder %v279, 1.0
    %v301 = vsel %vm300, 1, 0
    %v302 = vcvt.s32.f32 %v301
    %vm303 = vcmp.ge.f32.partialorder %v279, 1.6666666
    %v304 = vsel %vm303, 1, 0
    %v305 = vcvt.s32.f32 %v304
    %vm306 = vcmp.ge.f32.partialorder %v279, 2.3333333
    %v307 = vsel %vm306, 1, 0
    %v308 = vcvt.s32.f32 %v307
    %vm309 = vcmp.ge.f32.partialorder %v279, 3.0
    %v310 = vsel %vm309, 1, 0
    %v311 = vcvt.s32.f32 %v310
    %v312 = vsub.f32 %v284, %v287
    %v313 = vsub.f32 %v287, %v290
    %v314 = vsub.f32 %v290, %v293
    %v315 = vsub.f32 %v293, %v296
    %v316 = vsub.f32 %v296, %v299
    %v317 = vsub.f32 %v299, %v302
    %v318 = vsub.f32 %v302, %v305
    %v319 = vsub.f32 %v305, %v308
    %v320 = vsub.f32 %v308, %v311
    %v321 = vsub.f32 %v279, -3.0
    %v322 = vsub.f32 %v279, -2.3333333
    %v323 = vsub.f32 %v279, -1.6666666
    %v324 = vsub.f32 %v279, -1.0
    %v325 = vsub.f32 %v279, -0.33333334
    %v326 = vsub.f32 %v279, 0.33333334
    %v327 = vsub.f32 %v279, 1.0
    %v328 = vsub.f32 %v279, 1.6666666
    %v329 = vsub.f32 %v279, 2.3333333
    %v330 = vsub.f32 %v279, 3.0
    %v331 = vmul.f32 %v321, %v312
    %v332 = vmul.f32 %v323, %v313
    %v333 = vsub.f32 %v331, %v332
    %v334 = vmul.f32 %v333, 1.5
    %v335 = vmul.f32 %v322, %v313
    %v336 = vmul.f32 %v324, %v314
    %v337 = vsub.f32 %v335, %v336
    %v338 = vmul.f32 %v337, 1.5
    %v339 = vmul.f32 %v323, %v314
    %v340 = vmul.f32 %v325, %v315
    %v341 = vsub.f32 %v339, %v340
    %v342 = vmul.f32 %v341, 1.5
    %v343 = vmul.f32 %v324, %v315
    %v344 = vmul.f32 %v326, %v316
    %v345 = vsub.f32 %v343, %v344
    %v346 = vmul.f32 %v345, 1.5
    %v347 = vmul.f32 %v325, %v316
    %v348 = vmul.f32 %v327, %v317
    %v349 = vsub.f32 %v347, %v348
    %v350 = vmul.f32 %v349, 1.5
    %v351 = vmul.f32 %v326, %v317
    %v352 = vmul.f32 %v328, %v318
    %v353 = vsub.f32 %v351, %v352
    %v354 = vmul.f32 %v353, 1.5
    %v355 = vmul.f32 %v327, %v318
    %v356 = vmul.f32 %v329, %v319
    %v357 = vsub.f32 %v355, %v356
    %v358 = vmul.f32 %v357, 1.5
    %v359 = vmul.f32 %v328, %v319
    %v360 = vmul.f32 %v330, %v320
    %v361 = vsub.f32 %v359, %v360
    %v362 = vmul.f32 %v361, 1.5
    %v363 = vmul.f32 %v321, %v334
    %v364 = vmul.f32 %v324, %v338
    %v365 = vsub.f32 %v363, %v364
    %v366 = vmul.f32 %v365, 0.75
    %v367 = vmul.f32 %v322, %v338
    %v368 = vmul.f32 %v325, %v342
    %v369 = vsub.f32 %v367, %v368
    %v370 = vmul.f32 %v369, 0.75
    %v371 = vmul.f32 %v323, %v342
    %v372 = vmul.f32 %v326, %v346
    %v373 = vsub.f32 %v371, %v372
    %v374 = vmul.f32 %v373, 0.75
    %v375 = vmul.f32 %v324, %v346
    %v376 = vmul.f32 %v327, %v350
    %v377 = vsub.f32 %v375, %v376
    %v378 = vmul.f32 %v377, 0.75
    %v379 = vmul.f32 %v325, %v350
    %v380 = vmul.f32 %v328, %v354
    %v381 = vsub.f32 %v379, %v380
    %v382 = vmul.f32 %v381, 0.75
    %v383 = vmul.f32 %v326, %v354
    %v384 = vmul.f32 %v329, %v358
    %v385 = vsub.f32 %v383, %v384
    %v386 = vmul.f32 %v385, 0.75
    %v387 = vmul.f32 %v327, %v358
    %v388 = vmul.f32 %v330, %v362
    %v389 = vsub.f32 %v387, %v388
    %v390 = vmul.f32 %v389, 0.75
    %v391 = vmul.f32 %v321, %v366
    %v392 = vmul.f32 %v325, %v370
    %v393 = vsub.f32 %v391, %v392
    %v394 = vmul.f32 %v393, 0.5
    %v395 = vmul.f32 %v322, %v370
    %v396 = vmul.f32 %v326, %v374
    %v397 = vsub.f32 %v395, %v396
    %v398 = vmul.f32 %v397, 0.5
    %v399 = vmul.f32 %v323, %v374
    %v400 = vmul.f32 %v327, %v378
    %v401 = vsub.f32 %v399, %v400
    %v402 = vmul.f32 %v401, 0.5
    %v403 = vmul.f32 %v324, %v378
    %v404 = vmul.f32 %v328, %v382
    %v405 = vsub.f32 %v403, %v404
    %v406 = vmul.f32 %v405, 0.5
    %v407 = vmul.f32 %v325, %v382
    %v408 = vmul.f32 %v329, %v386
    %v409 = vsub.f32 %v407, %v408
    %v410 = vmul.f32 %v409, 0.5
    %v411 = vmul.f32 %v326, %v386
    %v412 = vmul.f32 %v330, %v390
    %v413 = vsub.f32 %v411, %v412
    %v414 = vmul.f32 %v413, 0.5
    %v415 = vmul.f32 %v279, 0.5
    %v416 = vtanh.pop %v415
    %v417 = vmul.f32 %v416, 0.5
    %v418 = vadd.f32 %v417, 0.5
    %v419 = vmul.f32 %v279, %v418
    %421 = vrot.lane.b32.xlu0 %v394, 32
    %v422 = vpop.permute.xlu0 %421
    %425 = vrot.lane.b32.xlu0 %v398, 64
    %v426 = vpop.permute.xlu0 %425
    %429 = vrot.lane.b32.xlu0 %v402, 96
    %v430 = vpop.permute.xlu0 %429
    %433 = vrot.lane.b32.xlu0 %v410, 32
    %v434 = vpop.permute.xlu0 %433
    %437 = vrot.lane.b32.xlu0 %v414, 64
    %v438 = vpop.permute.xlu0 %437
    %v440 = vsel %vm184, %v419, %v422
    %v441 = vsel %vm188, %v440, %v426
    %v442 = vsel %vm192, %v441, %v430
    %v443 = vsel %vm184, %v406, %v434
    %v444 = vsel %vm188, %v443, %v438
    %s445 = scalar_lea.vmem %s1, 224
    %v446 = vld [vmem:[%s445] sm:$0xff]
    %v447 = vld [vmem:[%s445 + $0x8] sm:$0xff]
    %v448 = vld [vmem:[%s445 + $0x10] sm:$0xff]
    %v449 = vld [vmem:[%s445 + $0x18] sm:$0xff]
    %v450 = vld [vmem:[%s445 + $0x20] sm:$0xff]
    %v451 = vld [vmem:[%s445 + $0x28] sm:$0xff]
    %v452 = vld [vmem:[%s445 + $0x30] sm:$0xff]
    %v453 = vld [vmem:[%s445 + $0x38] sm:$0xff]
    %v454 = vld [vmem:[%s445 + $0x40] sm:$0xff]
    %v455 = vld [vmem:[%s445 + $0x48] sm:$0xff]
    %v456 = vld [vmem:[%s445 + $0x50] sm:$0xff]
    %v457 = vld [vmem:[%s445 + $0x58] sm:$0xff]
    %v458 = vld [vmem:[%s445 + $0x60] sm:$0xff]
    %v459 = vld [vmem:[%s445 + $0x68] sm:$0xff]
    %v460 = vld [vmem:[%s445 + $0x70] sm:$0xff]
    %v461 = vld [vmem:[%s445 + $0x78] sm:$0xff]
    %v462 = vld [vmem:[%s445 + $0x80] sm:$0xff]
    %v463 = vld [vmem:[%s445 + $0x88] sm:$0xff]
    %v464 = vld [vmem:[%s445 + $0x90] sm:$0xff]
    %v465 = vld [vmem:[%s445 + $0x98] sm:$0xff]
    %v466 = vld [vmem:[%s445 + $0xa0] sm:$0xff]
    %v467 = vld [vmem:[%s445 + $0xa8] sm:$0xff]
    %v468 = vld [vmem:[%s445 + $0xb0] sm:$0xff]
    %v469 = vld [vmem:[%s445 + $0xb8] sm:$0xff]
    %v470 = vld [vmem:[%s445 + $0xc0] sm:$0xff]
    %v471 = vld [vmem:[%s445 + $0xc8] sm:$0xff]
    %v472 = vld [vmem:[%s445 + $0xd0] sm:$0xff]
    %v473 = vld [vmem:[%s445 + $0xd8] sm:$0xff]
    %v475 = vsel %vm192, %v444, 0
    %477 = vmatprep.subr.mxu0 0.0
    %478 = vmatpush1.msra.mxu0 %v446
    %479 = vmatprep.subr.mxu0 0.0
    %480 = vmatpush1.msra.mxu0 %v447
    %481 = vmatprep.subr.mxu0 0.0
    %482 = vmatpush1.msra.mxu0 %v448
    %483 = vmatprep.subr.mxu0 0.0
    %484 = vmatpush1.msra.mxu0 %v449
    %485 = vmatprep.subr.mxu0 0.0
    %486 = vmatpush1.msra.mxu0 %v450
    %487 = vmatprep.subr.mxu0 0.0
    %488 = vmatpush1.msra.mxu0 %v451
    %489 = vmatprep.subr.mxu0 0.0
    %490 = vmatpush1.msra.mxu0 %v452
    %491 = vmatprep.subr.mxu0 0.0
    %492 = vmatpush1.msra.mxu0 %v453
    %493 = vmatprep.subr.mxu0 0.0
    %494 = vmatpush1.msra.mxu0 %v454
    %495 = vmatprep.subr.mxu0 0.0
    %496 = vmatpush1.msra.mxu0 %v455
    %497 = vmatprep.subr.mxu0 0.0
    %498 = vmatpush1.msra.mxu0 %v456
    %499 = vmatprep.subr.mxu0 0.0
    %500 = vmatpush1.msra.mxu0 %v457
    %501 = vmatprep.subr.mxu0 0.0
    %502 = vmatpush1.msra.mxu0 %v458
    %503 = vmatprep.subr.mxu0 0.0
    %504 = vmatpush1.msra.mxu0 %v459
    %505 = vmatprep.subr.mxu0 0.0
    %506 = vmatpush1.msra.mxu0 %v460
    %507 = vmatprep.subr.mxu0 0.0
    %508 = vmatpush1.msra.mxu0 %v461
    %509 = vmatprep.subr.mxu0 0.0
    %510 = vmatpush1.msra.mxu0 %v462
    %511 = vmatprep.subr.mxu0 0.0
    %512 = vmatpush1.msra.mxu0 %v463
    %513 = vmatprep.subr.mxu0 0.0
    %514 = vmatpush1.msra.mxu0 %v464
    %515 = vmatprep.subr.mxu0 0.0
    %516 = vmatpush1.msra.mxu0 %v465
    %517 = vmatprep.subr.mxu0 0.0
    %518 = vmatpush1.msra.mxu0 %v466
    %519 = vmatprep.subr.mxu0 0.0
    %520 = vmatpush1.msra.mxu0 %v467
    %521 = vmatprep.subr.mxu0 0.0
    %522 = vmatpush1.msra.mxu0 %v468
    %523 = vmatprep.subr.mxu0 0.0
    %524 = vmatpush1.msra.mxu0 %v469
    %525 = vmatprep.subr.mxu0 0.0
    %526 = vmatpush1.msra.mxu0 %v470
    %527 = vmatprep.subr.mxu0 0.0
    %528 = vmatpush1.msra.mxu0 %v471
    %529 = vmatprep.subr.mxu0 0.0
    %530 = vmatpush1.msra.mxu0 %v472
    %531 = vmatprep.subr.mxu0 0.0
    %532 = vmatpush1.msra.mxu0 %v473
    %533 = vmatprep.subr.mxu0 0.0
    %534 = vmatpush1.msra.mxu0 0.0
    %535 = vmatprep.subr.mxu0 0.0
    %536 = vmatpush1.msra.mxu0 0.0
    %537 = vmatprep.subr.mxu0 0.0
    %538 = vmatpush1.msra.mxu0 0.0
    %539 = vmatprep.subr.mxu0 0.0
    %540 = vmatpush1.msra.mxu0 0.0
    %541 = vmatprep.mubr.f32.mxu0 %v475
    %542 = vmatmul.mubr.f32.gmra.mrb[0].mxu0 %v442
    %v543 = vpop.f32.mrb[0].mxu0
    %v544 = vadd.f32 0.0, %v543
    %v545 = vpop.f32.mrb[0].mxu0
    %546 = vdwg.mxu0
    %vm547 = vcmp.ge.f32.partialorder %v544, -3.0
    %v548 = vsel %vm547, 1, 0
    %v549 = vcvt.s32.f32 %v548
    %vm550 = vcmp.ge.f32.partialorder %v544, -2.3333333
    %v551 = vsel %vm550, 1, 0
    %v552 = vcvt.s32.f32 %v551
    %vm553 = vcmp.ge.f32.partialorder %v544, -1.6666666
    %v554 = vsel %vm553, 1, 0
    %v555 = vcvt.s32.f32 %v554
    %vm556 = vcmp.ge.f32.partialorder %v544, -1.0
    %v557 = vsel %vm556, 1, 0
    %v558 = vcvt.s32.f32 %v557
    %vm559 = vcmp.ge.f32.partialorder %v544, -0.33333334
    %v560 = vsel %vm559, 1, 0
    %v561 = vcvt.s32.f32 %v560
    %vm562 = vcmp.ge.f32.partialorder %v544, 0.33333334
    %v563 = vsel %vm562, 1, 0
    %v564 = vcvt.s32.f32 %v563
    %vm565 = vcmp.ge.f32.partialorder %v544, 1.0
    %v566 = vsel %vm565, 1, 0
    %v567 = vcvt.s32.f32 %v566
    %vm568 = vcmp.ge.f32.partialorder %v544, 1.6666666
    %v569 = vsel %vm568, 1, 0
    %v570 = vcvt.s32.f32 %v569
    %vm571 = vcmp.ge.f32.partialorder %v544, 2.3333333
    %v572 = vsel %vm571, 1, 0
    %v573 = vcvt.s32.f32 %v572
    %vm574 = vcmp.ge.f32.partialorder %v544, 3.0
    %v575 = vsel %vm574, 1, 0
    %v576 = vcvt.s32.f32 %v575
    %v577 = vsub.f32 %v549, %v552
    %v578 = vsub.f32 %v552, %v555
    %v579 = vsub.f32 %v555, %v558
    %v580 = vsub.f32 %v558, %v561
    %v581 = vsub.f32 %v561, %v564
    %v582 = vsub.f32 %v564, %v567
    %v583 = vsub.f32 %v567, %v570
    %v584 = vsub.f32 %v570, %v573
    %v585 = vsub.f32 %v573, %v576
    %v586 = vsub.f32 %v544, -3.0
    %v587 = vsub.f32 %v544, -2.3333333
    %v588 = vsub.f32 %v544, -1.6666666
    %v589 = vsub.f32 %v544, -1.0
    %v590 = vsub.f32 %v544, -0.33333334
    %v591 = vsub.f32 %v544, 0.33333334
    %v592 = vsub.f32 %v544, 1.0
    %v593 = vsub.f32 %v544, 1.6666666
    %v594 = vsub.f32 %v544, 2.3333333
    %v595 = vsub.f32 %v544, 3.0
    %v596 = vmul.f32 %v586, %v577
    %v597 = vmul.f32 %v588, %v578
    %v598 = vsub.f32 %v596, %v597
    %v599 = vmul.f32 %v598, 1.5
    %v600 = vmul.f32 %v587, %v578
    %v601 = vmul.f32 %v589, %v579
    %v602 = vsub.f32 %v600, %v601
    %v603 = vmul.f32 %v602, 1.5
    %v604 = vmul.f32 %v588, %v579
    %v605 = vmul.f32 %v590, %v580
    %v606 = vsub.f32 %v604, %v605
    %v607 = vmul.f32 %v606, 1.5
    %v608 = vmul.f32 %v589, %v580
    %v609 = vmul.f32 %v591, %v581
    %v610 = vsub.f32 %v608, %v609
    %v611 = vmul.f32 %v610, 1.5
    %v612 = vmul.f32 %v590, %v581
    %v613 = vmul.f32 %v592, %v582
    %v614 = vsub.f32 %v612, %v613
    %v615 = vmul.f32 %v614, 1.5
    %v616 = vmul.f32 %v591, %v582
    %v617 = vmul.f32 %v593, %v583
    %v618 = vsub.f32 %v616, %v617
    %v619 = vmul.f32 %v618, 1.5
    %v620 = vmul.f32 %v592, %v583
    %v621 = vmul.f32 %v594, %v584
    %v622 = vsub.f32 %v620, %v621
    %v623 = vmul.f32 %v622, 1.5
    %v624 = vmul.f32 %v593, %v584
    %v625 = vmul.f32 %v595, %v585
    %v626 = vsub.f32 %v624, %v625
    %v627 = vmul.f32 %v626, 1.5
    %v628 = vmul.f32 %v586, %v599
    %v629 = vmul.f32 %v589, %v603
    %v630 = vsub.f32 %v628, %v629
    %v631 = vmul.f32 %v630, 0.75
    %v632 = vmul.f32 %v587, %v603
    %v633 = vmul.f32 %v590, %v607
    %v634 = vsub.f32 %v632, %v633
    %v635 = vmul.f32 %v634, 0.75
    %v636 = vmul.f32 %v588, %v607
    %v637 = vmul.f32 %v591, %v611
    %v638 = vsub.f32 %v636, %v637
    %v639 = vmul.f32 %v638, 0.75
    %v640 = vmul.f32 %v589, %v611
    %v641 = vmul.f32 %v592, %v615
    %v642 = vsub.f32 %v640, %v641
    %v643 = vmul.f32 %v642, 0.75
    %v644 = vmul.f32 %v590, %v615
    %v645 = vmul.f32 %v593, %v619
    %v646 = vsub.f32 %v644, %v645
    %v647 = vmul.f32 %v646, 0.75
    %v648 = vmul.f32 %v591, %v619
    %v649 = vmul.f32 %v594, %v623
    %v650 = vsub.f32 %v648, %v649
    %v651 = vmul.f32 %v650, 0.75
    %v652 = vmul.f32 %v592, %v623
    %v653 = vmul.f32 %v595, %v627
    %v654 = vsub.f32 %v652, %v653
    %v655 = vmul.f32 %v654, 0.75
    %v656 = vmul.f32 %v586, %v631
    %v657 = vmul.f32 %v590, %v635
    %v658 = vsub.f32 %v656, %v657
    %v659 = vmul.f32 %v658, 0.5
    %v660 = vmul.f32 %v587, %v635
    %v661 = vmul.f32 %v591, %v639
    %v662 = vsub.f32 %v660, %v661
    %v663 = vmul.f32 %v662, 0.5
    %v664 = vmul.f32 %v588, %v639
    %v665 = vmul.f32 %v592, %v643
    %v666 = vsub.f32 %v664, %v665
    %v667 = vmul.f32 %v666, 0.5
    %v668 = vmul.f32 %v589, %v643
    %v669 = vmul.f32 %v593, %v647
    %v670 = vsub.f32 %v668, %v669
    %v671 = vmul.f32 %v670, 0.5
    %v672 = vmul.f32 %v590, %v647
    %v673 = vmul.f32 %v594, %v651
    %v674 = vsub.f32 %v672, %v673
    %v675 = vmul.f32 %v674, 0.5
    %v676 = vmul.f32 %v591, %v651
    %v677 = vmul.f32 %v595, %v655
    %v678 = vsub.f32 %v676, %v677
    %v679 = vmul.f32 %v678, 0.5
    %v680 = vmul.f32 %v544, 0.5
    %v681 = vtanh.pop %v680
    %v682 = vmul.f32 %v681, 0.5
    %v683 = vadd.f32 %v682, 0.5
    %v684 = vmul.f32 %v544, %v683
    %686 = vrot.lane.b32.xlu0 %v659, 16
    %v687 = vpop.permute.xlu0 %686
    %690 = vrot.lane.b32.xlu0 %v663, 32
    %v691 = vpop.permute.xlu0 %690
    %694 = vrot.lane.b32.xlu0 %v667, 48
    %v695 = vpop.permute.xlu0 %694
    %698 = vrot.lane.b32.xlu0 %v671, 64
    %v699 = vpop.permute.xlu0 %698
    %702 = vrot.lane.b32.xlu0 %v675, 80
    %v703 = vpop.permute.xlu0 %702
    %706 = vrot.lane.b32.xlu0 %v679, 96
    %v707 = vpop.permute.xlu0 %706
    %v709 = vsel %vm182, %v684, %v687
    %v710 = vsel %vm184, %v709, %v691
    %v711 = vsel %vm186, %v710, %v695
    %v712 = vsel %vm188, %v711, %v699
    %v713 = vsel %vm190, %v712, %v703
    %v714 = vsel %vm192, %v713, %v707
    %s715 = scalar_lea.vmem %s1, 448
    %v716 = vld [vmem:[%s715] sm:$0xff]
    %v717 = vld [vmem:[%s715 + $0x8] sm:$0xff]
    %v718 = vld [vmem:[%s715 + $0x10] sm:$0xff]
    %v719 = vld [vmem:[%s715 + $0x18] sm:$0xff]
    %v720 = vld [vmem:[%s715 + $0x20] sm:$0xff]
    %v721 = vld [vmem:[%s715 + $0x28] sm:$0xff]
    %v722 = vld [vmem:[%s715 + $0x30] sm:$0xff]
    %v723 = vld [vmem:[%s715 + $0x38] sm:$0xff]
    %v724 = vld [vmem:[%s715 + $0x40] sm:$0xff]
    %v725 = vld [vmem:[%s715 + $0x48] sm:$0xff]
    %v726 = vld [vmem:[%s715 + $0x50] sm:$0xff]
    %v727 = vld [vmem:[%s715 + $0x58] sm:$0xff]
    %v728 = vld [vmem:[%s715 + $0x60] sm:$0xff]
    %v729 = vld [vmem:[%s715 + $0x68] sm:$0xff]
    %v731 = vsel %vm208, %v714, 0
    %733 = vmatprep.subr.mxu0 0.0
    %734 = vmatpush1.msra.mxu0 %v716
    %735 = vmatprep.subr.mxu0 0.0
    %736 = vmatpush1.msra.mxu0 %v717
    %737 = vmatprep.subr.mxu0 0.0
    %738 = vmatpush1.msra.mxu0 %v718
    %739 = vmatprep.subr.mxu0 0.0
    %740 = vmatpush1.msra.mxu0 %v719
    %741 = vmatprep.subr.mxu0 0.0
    %742 = vmatpush1.msra.mxu0 %v720
    %743 = vmatprep.subr.mxu0 0.0
    %744 = vmatpush1.msra.mxu0 %v721
    %745 = vmatprep.subr.mxu0 0.0
    %746 = vmatpush1.msra.mxu0 %v722
    %747 = vmatprep.subr.mxu0 0.0
    %748 = vmatpush1.msra.mxu0 %v723
    %749 = vmatprep.subr.mxu0 0.0
    %750 = vmatpush1.msra.mxu0 %v724
    %751 = vmatprep.subr.mxu0 0.0
    %752 = vmatpush1.msra.mxu0 %v725
    %753 = vmatprep.subr.mxu0 0.0
    %754 = vmatpush1.msra.mxu0 %v726
    %755 = vmatprep.subr.mxu0 0.0
    %756 = vmatpush1.msra.mxu0 %v727
    %757 = vmatprep.subr.mxu0 0.0
    %758 = vmatpush1.msra.mxu0 %v728
    %759 = vmatprep.subr.mxu0 0.0
    %760 = vmatpush1.msra.mxu0 %v729
    %761 = vmatprep.subr.mxu0 0.0
    %762 = vmatpush1.msra.mxu0 0.0
    %763 = vmatprep.subr.mxu0 0.0
    %764 = vmatpush1.msra.mxu0 0.0
    %765 = vmatprep.subr.mxu0 0.0
    %766 = vmatpush1.msra.mxu0 0.0
    %767 = vmatprep.subr.mxu0 0.0
    %768 = vmatpush1.msra.mxu0 0.0
    %769 = vmatprep.subr.mxu0 0.0
    %770 = vmatpush1.msra.mxu0 0.0
    %771 = vmatprep.subr.mxu0 0.0
    %772 = vmatpush1.msra.mxu0 0.0
    %773 = vmatprep.subr.mxu0 0.0
    %774 = vmatpush1.msra.mxu0 0.0
    %775 = vmatprep.subr.mxu0 0.0
    %776 = vmatpush1.msra.mxu0 0.0
    %777 = vmatprep.subr.mxu0 0.0
    %778 = vmatpush1.msra.mxu0 0.0
    %779 = vmatprep.subr.mxu0 0.0
    %780 = vmatpush1.msra.mxu0 0.0
    %781 = vmatprep.subr.mxu0 0.0
    %782 = vmatpush1.msra.mxu0 0.0
    %783 = vmatprep.subr.mxu0 0.0
    %784 = vmatpush1.msra.mxu0 0.0
    %785 = vmatprep.subr.mxu0 0.0
    %786 = vmatpush1.msra.mxu0 0.0
    %787 = vmatprep.subr.mxu0 0.0
    %788 = vmatpush1.msra.mxu0 0.0
    %789 = vmatprep.subr.mxu0 0.0
    %790 = vmatpush1.msra.mxu0 0.0
    %791 = vmatprep.subr.mxu0 0.0
    %792 = vmatpush1.msra.mxu0 0.0
    %793 = vmatprep.subr.mxu0 0.0
    %794 = vmatpush1.msra.mxu0 0.0
    %795 = vmatprep.subr.mxu0 0.0
    %796 = vmatpush1.msra.mxu0 0.0
    %797 = vmatprep.mubr.f32.mxu0 0.0
    %798 = vmatmul.mubr.f32.gmra.mrb[0].mxu0 %v731
    %v799 = vpop.f32.mrb[0].mxu0
    %v800 = vadd.f32 0.0, %v799
    %v801 = vpop.f32.mrb[0].mxu0
    %802 = vdwg.mxu0
    %s803 = scalar_lea.vmem %s1, 672
    %v804 = vld [vmem:[%s803] sm:$0xff]
    %v805 = vld [vmem:[%s803 + $0x8] sm:$0xff]
    %v806 = vld [vmem:[%s2] sm:$0x3]
    %v807 = vlaneseq
    %v808 = vshrl.u32 %v807, 7
    %v809 = vsub.s32 0, %v808
    %v810 = vrot.slane %v806, %v809
    %vm811 = vcmask 64512
    %v813 = vsel %vm811, %v800, 0
    %815 = vmatprep.subr.mxu0 0.0
    %816 = vmatpush1.msra.mxu0 %v804
    %817 = vmatprep.subr.mxu0 0.0
    %818 = vmatpush1.msra.mxu0 0.0
    %819 = vmatprep.subr.mxu0 0.0
    %820 = vmatpush1.msra.mxu0 0.0
    %821 = vmatprep.subr.mxu0 0.0
    %822 = vmatpush1.msra.mxu0 0.0
    %823 = vmatprep.subr.mxu0 0.0
    %824 = vmatpush1.msra.mxu0 0.0
    %825 = vmatprep.subr.mxu0 0.0
    %826 = vmatpush1.msra.mxu0 0.0
    %827 = vmatprep.subr.mxu0 0.0
    %828 = vmatpush1.msra.mxu0 0.0
    %829 = vmatprep.subr.mxu0 0.0
    %830 = vmatpush1.msra.mxu0 0.0
    %831 = vmatprep.subr.mxu0 0.0
    %832 = vmatpush1.msra.mxu0 0.0
    %833 = vmatprep.subr.mxu0 0.0
    %834 = vmatpush1.msra.mxu0 0.0
    %835 = vmatprep.subr.mxu0 0.0
    %836 = vmatpush1.msra.mxu0 0.0
    %837 = vmatprep.subr.mxu0 0.0
    %838 = vmatpush1.msra.mxu0 0.0
    %839 = vmatprep.subr.mxu0 0.0
    %840 = vmatpush1.msra.mxu0 0.0
    %841 = vmatprep.subr.mxu0 0.0
    %842 = vmatpush1.msra.mxu0 0.0
    %843 = vmatprep.subr.mxu0 0.0
    %844 = vmatpush1.msra.mxu0 0.0
    %845 = vmatprep.subr.mxu0 0.0
    %846 = vmatpush1.msra.mxu0 0.0
    %847 = vmatprep.subr.mxu0 0.0
    %848 = vmatpush1.msra.mxu0 0.0
    %849 = vmatprep.subr.mxu0 0.0
    %850 = vmatpush1.msra.mxu0 0.0
    %851 = vmatprep.subr.mxu0 0.0
    %852 = vmatpush1.msra.mxu0 0.0
    %853 = vmatprep.subr.mxu0 0.0
    %854 = vmatpush1.msra.mxu0 0.0
    %855 = vmatprep.subr.mxu0 0.0
    %856 = vmatpush1.msra.mxu0 0.0
    %857 = vmatprep.subr.mxu0 0.0
    %858 = vmatpush1.msra.mxu0 0.0
    %859 = vmatprep.subr.mxu0 0.0
    %860 = vmatpush1.msra.mxu0 0.0
    %861 = vmatprep.subr.mxu0 0.0
    %862 = vmatpush1.msra.mxu0 0.0
    %863 = vmatprep.subr.mxu0 0.0
    %864 = vmatpush1.msra.mxu0 0.0
    %865 = vmatprep.subr.mxu0 0.0
    %866 = vmatpush1.msra.mxu0 0.0
    %867 = vmatprep.subr.mxu0 0.0
    %868 = vmatpush1.msra.mxu0 0.0
    %869 = vmatprep.subr.mxu0 0.0
    %870 = vmatpush1.msra.mxu0 0.0
    %871 = vmatprep.subr.mxu0 0.0
    %872 = vmatpush1.msra.mxu0 0.0
    %873 = vmatprep.subr.mxu0 0.0
    %874 = vmatpush1.msra.mxu0 0.0
    %875 = vmatprep.subr.mxu0 0.0
    %876 = vmatpush1.msra.mxu0 0.0
    %877 = vmatprep.subr.mxu0 0.0
    %878 = vmatpush1.msra.mxu0 0.0
    %879 = vmatprep.mubr.f32.mxu0 0.0
    %880 = vmatmul.mubr.f32.gmra.mrb[0].mxu0 %v813
    %v881 = vpop.f32.mrb[0].mxu0
    %v882 = vadd.f32 %v810, %v881
    %v883 = vpop.f32.mrb[0].mxu0
    %884 = vdwg.mxu0
    %v885 = vlaneseq
    %v886 = vshrl.u32 %v885, 7
    %v887 = vsub.s32 1, %v886
    %v888 = vrot.slane %v806, %v887
    %889 = vmatprep.subr.mxu0 0.0
    %890 = vmatpush1.msra.mxu0 %v805
    %891 = vmatprep.subr.mxu0 0.0
    %892 = vmatpush1.msra.mxu0 0.0
    %893 = vmatprep.subr.mxu0 0.0
    %894 = vmatpush1.msra.mxu0 0.0
    %895 = vmatprep.subr.mxu0 0.0
    %896 = vmatpush1.msra.mxu0 0.0
    %897 = vmatprep.subr.mxu0 0.0
    %898 = vmatpush1.msra.mxu0 0.0
    %899 = vmatprep.subr.mxu0 0.0
    %900 = vmatpush1.msra.mxu0 0.0
    %901 = vmatprep.subr.mxu0 0.0
    %902 = vmatpush1.msra.mxu0 0.0
    %903 = vmatprep.subr.mxu0 0.0
    %904 = vmatpush1.msra.mxu0 0.0
    %905 = vmatprep.subr.mxu0 0.0
    %906 = vmatpush1.msra.mxu0 0.0
    %907 = vmatprep.subr.mxu0 0.0
    %908 = vmatpush1.msra.mxu0 0.0
    %909 = vmatprep.subr.mxu0 0.0
    %910 = vmatpush1.msra.mxu0 0.0
    %911 = vmatprep.subr.mxu0 0.0
    %912 = vmatpush1.msra.mxu0 0.0
    %913 = vmatprep.subr.mxu0 0.0
    %914 = vmatpush1.msra.mxu0 0.0
    %915 = vmatprep.subr.mxu0 0.0
    %916 = vmatpush1.msra.mxu0 0.0
    %917 = vmatprep.subr.mxu0 0.0
    %918 = vmatpush1.msra.mxu0 0.0
    %919 = vmatprep.subr.mxu0 0.0
    %920 = vmatpush1.msra.mxu0 0.0
    %921 = vmatprep.subr.mxu0 0.0
    %922 = vmatpush1.msra.mxu0 0.0
    %923 = vmatprep.subr.mxu0 0.0
    %924 = vmatpush1.msra.mxu0 0.0
    %925 = vmatprep.subr.mxu0 0.0
    %926 = vmatpush1.msra.mxu0 0.0
    %927 = vmatprep.subr.mxu0 0.0
    %928 = vmatpush1.msra.mxu0 0.0
    %929 = vmatprep.subr.mxu0 0.0
    %930 = vmatpush1.msra.mxu0 0.0
    %931 = vmatprep.subr.mxu0 0.0
    %932 = vmatpush1.msra.mxu0 0.0
    %933 = vmatprep.subr.mxu0 0.0
    %934 = vmatpush1.msra.mxu0 0.0
    %935 = vmatprep.subr.mxu0 0.0
    %936 = vmatpush1.msra.mxu0 0.0
    %937 = vmatprep.subr.mxu0 0.0
    %938 = vmatpush1.msra.mxu0 0.0
    %939 = vmatprep.subr.mxu0 0.0
    %940 = vmatpush1.msra.mxu0 0.0
    %941 = vmatprep.subr.mxu0 0.0
    %942 = vmatpush1.msra.mxu0 0.0
    %943 = vmatprep.subr.mxu0 0.0
    %944 = vmatpush1.msra.mxu0 0.0
    %945 = vmatprep.subr.mxu0 0.0
    %946 = vmatpush1.msra.mxu0 0.0
    %947 = vmatprep.subr.mxu0 0.0
    %948 = vmatpush1.msra.mxu0 0.0
    %949 = vmatprep.subr.mxu0 0.0
    %950 = vmatpush1.msra.mxu0 0.0
    %951 = vmatprep.subr.mxu0 0.0
    %952 = vmatpush1.msra.mxu0 0.0
    %953 = vmatprep.mubr.f32.mxu0 0.0
    %954 = vmatmul.mubr.f32.gmra.mrb[0].mxu0 %v813
    %v955 = vpop.f32.mrb[0].mxu0
    %v956 = vadd.f32 %v888, %v955
    %v957 = vpop.f32.mrb[0].mxu0
    %958 = vdwg.mxu0
    %959 = vst.msk [vmem:[#allocation2] sm:$0xff] %vm811, %v882
    %960 = vst.msk [vmem:[#allocation4] sm:$0xff] %vm811, %v956
    %v961 = vmul.f32 %v956, 0.5
    %v962 = vmul.f32 %v961, 1.442695
    %v963 = vpow.pop %v962
    %964 = vst.msk [vmem:[#allocation6] sm:$0xff] %vm811, %v963
    // Predicated region
    $region14: #{tpu_custom_call.1} parent=1 // pred_check
      _
    $region15: #{tpu_custom_call.1} parent=1 // pred_check_branch
      %966 = sbr.rel (0) target = $region17
    $region16: #{tpu_custom_call.1} parent=1 // pred_region
      %s968 = ssub.s32 128, 128
      %969 = vsyncadd [#allocation3], %s968
      %s971 = sshll.u32 [#allocation2], 4
      %s972 = int_to_ptr.vmem [resolvable:$true] %s971
      %974 = dma.vmem_to_hbm [thread:$0]  %s972, 128, %s3, [#allocation3]
    $region17: #{tpu_custom_call.1} parent=1 // pred_fallthru
      _
    // Predicated region
    $region18: #{tpu_custom_call.1} parent=1 // pred_check
      _
    $region19: #{tpu_custom_call.1} parent=1 // pred_check_branch
      %976 = sbr.rel (0) target = $region21
    $region20: #{tpu_custom_call.1} parent=1 // pred_region
      %s978 = ssub.s32 128, 128
      %979 = vsyncadd [#allocation5], %s978
      %s981 = sshll.u32 [#allocation4], 4
      %s982 = int_to_ptr.vmem [resolvable:$true] %s981
      %984 = dma.vmem_to_hbm [thread:$0]  %s982, 128, %s4, [#allocation5]
    $region21: #{tpu_custom_call.1} parent=1 // pred_fallthru
      _
    // Predicated region
    $region22: #{tpu_custom_call.1} parent=1 // pred_check
      _
    $region23: #{tpu_custom_call.1} parent=1 // pred_check_branch
      %986 = sbr.rel (0) target = $region25
    $region24: #{tpu_custom_call.1} parent=1 // pred_region
      %s988 = ssub.s32 128, 128
      %989 = vsyncadd [#allocation5], %s988
      %s991 = sshll.u32 [#allocation6], 4
      %s992 = int_to_ptr.vmem [resolvable:$true] %s991
      %994 = dma.vmem_to_hbm [thread:$0]  %s992, 128, %s5, [#allocation5]
    $region25: #{tpu_custom_call.1} parent=1 // pred_fallthru
      _
    // Predicated region
    $region26: #{tpu_custom_call.1} parent=1 // pred_check
      _
    $region27: #{tpu_custom_call.1} parent=1 // pred_check_branch
      %996 = sbr.rel (0) target = $region29
    $region28: #{tpu_custom_call.1} parent=1 // pred_region
      %997 = dma.done [#allocation3], 128
    $region29: #{tpu_custom_call.1} parent=1 // pred_fallthru
      _
    // Predicated region
    $region30: #{tpu_custom_call.1} parent=1 // pred_check
      _
    $region31: #{tpu_custom_call.1} parent=1 // pred_check_branch
      %999 = sbr.rel (0) target = $region33
    $region32: #{tpu_custom_call.1} parent=1 // pred_region
      %1000 = dma.done [#allocation5], 128
    $region33: #{tpu_custom_call.1} parent=1 // pred_fallthru
      _
    // Predicated region
    $region34: #{tpu_custom_call.1} parent=1 // pred_check
      _
    $region35: #{tpu_custom_call.1} parent=1 // pred_check_branch
      %1002 = sbr.rel (0) target = $region37
    $region36: #{tpu_custom_call.1} parent=1 // pred_region
      %1003 = dma.done [#allocation5], 128
    $region37: #{tpu_custom_call.1} parent=1 // pred_fallthru
      _
    %1004 = vsyncpa [#allocation3], 1
    %1005 = vsyncpa [#allocation5], 1

</llo_original>
